<compile_context>
chip_gen: v5e
topology: v5e:2x2
jax: 0.10.0
libtpu: 0.0.40
codegen_flags: <defaults>
</compile_context>

<pallas_src>
import jax
import jax.numpy as jnp
import numpy as np
from jax.experimental import pallas as pl
from jax.experimental.pallas import tpu as pltpu

EPS = 1e-5
H1, H2, H3 = 256, 128, 256  # hidden widths fixed by the module


# ------------------------------ kernel ---------------------------------------

def fused_kernel(x_ref, wa_ref, wb_ref, bn_ref, out_ref):
    """Both branches of the regressor in one straight-line body.

    x_ref:   [C*B, D]             input, class-major rows (rows c*B..c*B+B-1 = class c)
    wa_ref:  [2, H1, H2+D]        per-branch [w2 | w4] packed along lanes
    wb_ref:  [2, H2+D+1, H3]      per-branch [w3 ; w1 ; b4] packed along rows
    bn_ref:  [2, 2, C, H1+H2+H3]  per-branch {gamma, beta} packed along lanes
    out_ref: [2, C*B, D]
    """
    M, D = x_ref.shape
    C = bn_ref.shape[2]
    B = M // C
    x = x_ref[...]                                             # [M, D]

    def class_bn_relu(h, gamma, beta):
        # Per-class BatchNorm1d (training mode, biased variance) + ReLU.
        # h: [M, H] class-major; gamma/beta: [C, H].
        H = h.shape[-1]
        h3 = h.reshape(C, B, H)                                # tile-aligned split (B = sublane group)
        mean = jnp.mean(h3, axis=1, keepdims=True)             # [C, 1, H]  sublane reduce (VPU/XLU)
        cent = h3 - mean
        var = jnp.mean(cent * cent, axis=1, keepdims=True)     # [C, 1, H]
        scale = gamma[:, None, :] * jax.lax.rsqrt(var + EPS)   # gamma folded into scale; rsqrt -> EUP
        out = jnp.maximum(cent * scale + beta[:, None, :], 0.0)
        return out.reshape(M, H)

    def branch(k):
        # Static, tile-aligned slices out of the packed parameter blobs.
        w1 = wb_ref[k, H2:H2 + D, :]                           # [D,  H1]
        w2 = wa_ref[k, :, 0:H2]                                # [H1, H2]
        w3 = wb_ref[k, 0:H2, :]                                # [H2, H3]
        w4 = wa_ref[k, :, H2:H2 + D]                           # [H3, D ]
        b4 = wb_ref[k, H2 + D:H2 + D + 1, 0:D]                 # [1,  D ]

        # fc1..fc3 biases omitted: they cancel exactly against the BN mean
        # subtraction that immediately follows each of them.
        h = jnp.dot(x, w1, preferred_element_type=jnp.float32)
        h = class_bn_relu(h, bn_ref[k, 0, :, 0:H1], bn_ref[k, 1, :, 0:H1])
        h = jnp.dot(h, w2, preferred_element_type=jnp.float32)
        h = class_bn_relu(h, bn_ref[k, 0, :, H1:H1 + H2], bn_ref[k, 1, :, H1:H1 + H2])
        h = jnp.dot(h, w3, preferred_element_type=jnp.float32)
        h = class_bn_relu(h, bn_ref[k, 0, :, H1 + H2:], bn_ref[k, 1, :, H1 + H2:])
        return jnp.dot(h, w4, preferred_element_type=jnp.float32) + b4

    # Two independent chains; straight-lining lets the scheduler interleave them.
    out_ref[0] = branch(0).astype(out_ref.dtype)
    out_ref[1] = branch(1).astype(out_ref.dtype)


# ------------------------------ wrapper ---------------------------------------

@jax.jit
def mean_variance_regressor(x, params):
    """x: [B, num_class, latent_dim] (PyTorch layout).

    params: 14 arrays, each stacked over the branch axis {0: mean, 1: variance}.
    Returns (m, v), each [B, num_class, latent_dim].
    """
    (w1, b1, w2, b2, w3, b3, w4, b4,
     g1, be1, g2, be2, g3, be3) = params
    del b1, b2, b3   # bias-before-BatchNorm cancels algebraically; kernel skips them

    B, C, D = x.shape
    M = B * C

    # Class-major flat input: row c*B + b <- x[b, c].  Tiny (4 KB) XLA transpose.
    xcb = jnp.transpose(x, (1, 0, 2)).reshape(M, D)

    # Pack the 12 used parameter arrays into 3 blobs -> 4 input DMAs total.
    wa = jnp.concatenate([w2, w4], axis=2)                           # [2, H1, H2+D]
    b4_pad = jnp.pad(b4, ((0, 0), (0, 0), (0, H3 - D)))              # [2, 1, H3]
    wb = jnp.concatenate([w3, w1, b4_pad], axis=1)                   # [2, H2+D+1, H3]
    bn = jnp.stack([jnp.concatenate([g1, g2, g3], axis=2),
                    jnp.concatenate([be1, be2, be3], axis=2)],
                   axis=1)                                           # [2, 2, C, H1+H2+H3]

    vmem = pl.BlockSpec(memory_space=pltpu.MemorySpace.VMEM)
    out = pl.pallas_call(
        fused_kernel,
        out_shape=jax.ShapeDtypeStruct((2, M, D), x.dtype),
        in_specs=[vmem, vmem, vmem, vmem],
        out_specs=vmem,
    )(xcb, wa, wb, bn)

    # Back to the PyTorch layout; tiny (8 KB) XLA transpose.
    mv = jnp.transpose(out.reshape(2, C, B, D), (0, 2, 1, 3))        # [2, B, C, D]
    return mv[0], mv[1]


# ------------------------- pure-JAX reference ---------------------------------

def _ref_bn_relu(h, gamma, beta):
    # h: [B, C, H]; gamma/beta: [C, H]; BN stats over the batch axis per class.
    mean = jnp.mean(h, axis=0, keepdims=True)
    var = jnp.mean(jnp.square(h - mean), axis=0, keepdims=True)
    hn = (h - mean) * jax.lax.rsqrt(var + EPS)
    return jnp.maximum(hn * gamma[None] + beta[None], 0.0)


def _ref_forward(x, params):
    w1, b1, w2, b2, w3, b3, w4, b4, g1, be1, g2, be2, g3, be3 = params

    def branch(k):
        h = x @ w1[k] + b1[k]
        h = _ref_bn_relu(h, g1[k], be1[k])
        h = h @ w2[k] + b2[k]
        h = _ref_bn_relu(h, g2[k], be2[k])
        h = h @ w3[k] + b3[k]
        h = _ref_bn_relu(h, g3[k], be3[k])
        return h @ w4[k] + b4[k]

    return branch(0), branch(1)


# ------------------------- parameter construction ------------------------------

def make_params(key, latent_dim, num_class):
    """All parameters pre-stacked over the branch axis {0: mean, 1: variance}."""
    ks = jax.random.split(key, 14)

    def w(k, i, o):   # stored already transposed: [in, out]
        return (jax.random.normal(k, (2, i, o), jnp.float32) / np.sqrt(i)).astype(jnp.float32)

    def b(k, o):
        return (0.05 * jax.random.normal(k, (2, 1, o), jnp.float32)).astype(jnp.float32)

    def bn_g(k, o):
        return (1.0 + 0.1 * jax.random.normal(k, (2, num_class, o), jnp.float32)).astype(jnp.float32)

    def bn_b(k, o):
        return (0.1 * jax.random.normal(k, (2, num_class, o), jnp.float32)).astype(jnp.float32)

    return (
        w(ks[0], latent_dim, H1), b(ks[1], H1),
        w(ks[2], H1, H2), b(ks[3], H2),
        w(ks[4], H2, H3), b(ks[5], H3),
        w(ks[6], H3, latent_dim), b(ks[7], latent_dim),
        bn_g(ks[8], H1), bn_b(ks[9], H1),
        bn_g(ks[10], H2), bn_b(ks[11], H2),
        bn_g(ks[12], H3), bn_b(ks[13], H3),
    )


if __name__ == "__main__":
    batch, num_class, latent_dim = 8, 4, 32

    key = jax.random.PRNGKey(0)
    kx, kp = jax.random.split(key)

    x = jax.random.normal(kx, (batch, num_class, latent_dim), jnp.float32)
    params = make_params(kp, latent_dim, num_class)

    m, v = mean_variance_regressor(x, params)
    m, v = jax.block_until_ready((m, v))

    # correctness check against a pure-JAX reference (which DOES apply the
    # fc1..fc3 biases -- they cancel under BatchNorm, so results match).
    m_ref, v_ref = _ref_forward(x, params)
    np.testing.assert_allclose(np.asarray(m), np.asarray(m_ref), rtol=1e-4, atol=1e-4)
    np.testing.assert_allclose(np.asarray(v), np.asarray(v_ref), rtol=1e-4, atol=1e-4)

    print("KERNEL_OK")
</pallas_src>

<mosaic_0001>
module attributes {stable_mosaic.version = 11 : i64} {
  func.func @fused_kernel(%arg0: memref<32x32xf32, #tpu.memory_space<vmem>>, %arg1: memref<2x256x160xf32, #tpu.memory_space<vmem>>, %arg2: memref<2x161x256xf32, #tpu.memory_space<vmem>>, %arg3: memref<2x2x4x640xf32, #tpu.memory_space<vmem>>, %arg4: memref<2x32x32xf32, #tpu.memory_space<vmem>>) attributes {dimension_semantics = [], scalar_prefetch = 0 : i64, scratch_operands = 0 : i64, tpu.core_type = #tpu.core_type<tc>} {
    %c0 = arith.constant 0 : index
    %c0_0 = arith.constant 0 : index
    %0 = vector.load %arg0[%c0, %c0_0] : memref<32x32xf32, #tpu.memory_space<vmem>>, vector<32x32xf32>
    %c0_1 = arith.constant 0 : index
    %c128 = arith.constant 128 : index
    %c0_2 = arith.constant 0 : index
    %1 = vector.load %arg2[%c0_1, %c128, %c0_2] : memref<2x161x256xf32, #tpu.memory_space<vmem>>, vector<1x32x256xf32>
    %2 = vector.shape_cast %1 : vector<1x32x256xf32> to vector<32x256xf32>
    %c0_3 = arith.constant 0 : index
    %c0_4 = arith.constant 0 : index
    %c0_5 = arith.constant 0 : index
    %3 = vector.load %arg1[%c0_3, %c0_4, %c0_5] : memref<2x256x160xf32, #tpu.memory_space<vmem>>, vector<1x256x128xf32>
    %4 = vector.shape_cast %3 : vector<1x256x128xf32> to vector<256x128xf32>
    %c0_6 = arith.constant 0 : index
    %c0_7 = arith.constant 0 : index
    %c0_8 = arith.constant 0 : index
    %5 = vector.load %arg2[%c0_6, %c0_7, %c0_8] : memref<2x161x256xf32, #tpu.memory_space<vmem>>, vector<1x128x256xf32>
    %6 = vector.shape_cast %5 : vector<1x128x256xf32> to vector<128x256xf32>
    %c0_9 = arith.constant 0 : index
    %c0_10 = arith.constant 0 : index
    %c128_11 = arith.constant 128 : index
    %7 = vector.load %arg1[%c0_9, %c0_10, %c128_11] : memref<2x256x160xf32, #tpu.memory_space<vmem>>, vector<1x256x32xf32>
    %8 = vector.shape_cast %7 : vector<1x256x32xf32> to vector<256x32xf32>
    %c0_12 = arith.constant 0 : index
    %c160 = arith.constant 160 : index
    %c0_13 = arith.constant 0 : index
    %9 = vector.load %arg2[%c0_12, %c160, %c0_13] : memref<2x161x256xf32, #tpu.memory_space<vmem>>, vector<1x1x32xf32>
    %10 = vector.shape_cast %9 : vector<1x1x32xf32> to vector<1x32xf32>
    %cst = arith.constant dense<0.000000e+00> : vector<32x256xf32>
    %11 = tpu.matmul %0, %2, %cst {dimension_numbers = #tpu.dot_dimension_numbers<[1], [0], [0], [1], [0, 0, 1, 1], [], []>} : vector<32x32xf32>, vector<32x256xf32>, vector<32x256xf32> -> vector<32x256xf32>
    %c0_14 = arith.constant 0 : index
    %c0_15 = arith.constant 0 : index
    %c0_16 = arith.constant 0 : index
    %c0_17 = arith.constant 0 : index
    %12 = vector.load %arg3[%c0_14, %c0_15, %c0_16, %c0_17] : memref<2x2x4x640xf32, #tpu.memory_space<vmem>>, vector<1x1x4x256xf32>
    %13 = vector.shape_cast %12 : vector<1x1x4x256xf32> to vector<4x256xf32>
    %c0_18 = arith.constant 0 : index
    %c1 = arith.constant 1 : index
    %c0_19 = arith.constant 0 : index
    %c0_20 = arith.constant 0 : index
    %14 = vector.load %arg3[%c0_18, %c1, %c0_19, %c0_20] : memref<2x2x4x640xf32, #tpu.memory_space<vmem>>, vector<1x1x4x256xf32>
    %15 = vector.shape_cast %14 : vector<1x1x4x256xf32> to vector<4x256xf32>
    %16 = vector.shape_cast %11 : vector<32x256xf32> to vector<4x8x256xf32>
    %cst_21 = arith.constant dense<0.000000e+00> : vector<4x256xf32>
    %17 = vector.multi_reduction <add>, %16, %cst_21 [1] : vector<4x8x256xf32> to vector<4x256xf32>
    %18 = vector.shape_cast %17 : vector<4x256xf32> to vector<4x1x256xf32>
    %cst_22 = arith.constant 8.000000e+00 : f32
    %19 = vector.broadcast %cst_22 : f32 to vector<4x1x256xf32>
    %20 = arith.divf %18, %19 : vector<4x1x256xf32>
    %21 = vector.broadcast %20 : vector<4x1x256xf32> to vector<4x8x256xf32>
    %22 = arith.subf %16, %21 : vector<4x8x256xf32>
    %23 = arith.mulf %22, %22 : vector<4x8x256xf32>
    %cst_23 = arith.constant dense<0.000000e+00> : vector<4x256xf32>
    %24 = vector.multi_reduction <add>, %23, %cst_23 [1] : vector<4x8x256xf32> to vector<4x256xf32>
    %25 = vector.shape_cast %24 : vector<4x256xf32> to vector<4x1x256xf32>
    %cst_24 = arith.constant 8.000000e+00 : f32
    %26 = vector.broadcast %cst_24 : f32 to vector<4x1x256xf32>
    %27 = arith.divf %25, %26 : vector<4x1x256xf32>
    %28 = vector.shape_cast %13 : vector<4x256xf32> to vector<4x1x256xf32>
    %cst_25 = arith.constant 9.99999974E-6 : f32
    %29 = vector.broadcast %cst_25 : f32 to vector<4x1x256xf32>
    %30 = arith.addf %27, %29 : vector<4x1x256xf32>
    %31 = math.rsqrt %30 : vector<4x1x256xf32>
    %32 = arith.mulf %28, %31 : vector<4x1x256xf32>
    %33 = vector.broadcast %32 : vector<4x1x256xf32> to vector<4x8x256xf32>
    %34 = arith.mulf %22, %33 : vector<4x8x256xf32>
    %35 = vector.shape_cast %15 : vector<4x256xf32> to vector<4x1x256xf32>
    %36 = vector.broadcast %35 : vector<4x1x256xf32> to vector<4x8x256xf32>
    %37 = arith.addf %34, %36 : vector<4x8x256xf32>
    %cst_26 = arith.constant 0.000000e+00 : f32
    %38 = vector.broadcast %cst_26 : f32 to vector<4x8x256xf32>
    %39 = arith.maximumf %37, %38 : vector<4x8x256xf32>
    %40 = vector.shape_cast %39 : vector<4x8x256xf32> to vector<32x256xf32>
    %cst_27 = arith.constant dense<0.000000e+00> : vector<32x128xf32>
    %41 = tpu.matmul %40, %4, %cst_27 {dimension_numbers = #tpu.dot_dimension_numbers<[1], [0], [0], [1], [0, 0, 1, 1], [], []>} : vector<32x256xf32>, vector<256x128xf32>, vector<32x128xf32> -> vector<32x128xf32>
    %c0_28 = arith.constant 0 : index
    %c0_29 = arith.constant 0 : index
    %c0_30 = arith.constant 0 : index
    %c256 = arith.constant 256 : index
    %42 = vector.load %arg3[%c0_28, %c0_29, %c0_30, %c256] : memref<2x2x4x640xf32, #tpu.memory_space<vmem>>, vector<1x1x4x128xf32>
    %43 = vector.shape_cast %42 : vector<1x1x4x128xf32> to vector<4x128xf32>
    %c0_31 = arith.constant 0 : index
    %c1_32 = arith.constant 1 : index
    %c0_33 = arith.constant 0 : index
    %c256_34 = arith.constant 256 : index
    %44 = vector.load %arg3[%c0_31, %c1_32, %c0_33, %c256_34] : memref<2x2x4x640xf32, #tpu.memory_space<vmem>>, vector<1x1x4x128xf32>
    %45 = vector.shape_cast %44 : vector<1x1x4x128xf32> to vector<4x128xf32>
    %46 = vector.shape_cast %41 : vector<32x128xf32> to vector<4x8x128xf32>
    %cst_35 = arith.constant dense<0.000000e+00> : vector<4x128xf32>
    %47 = vector.multi_reduction <add>, %46, %cst_35 [1] : vector<4x8x128xf32> to vector<4x128xf32>
    %48 = vector.shape_cast %47 : vector<4x128xf32> to vector<4x1x128xf32>
    %cst_36 = arith.constant 8.000000e+00 : f32
    %49 = vector.broadcast %cst_36 : f32 to vector<4x1x128xf32>
    %50 = arith.divf %48, %49 : vector<4x1x128xf32>
    %51 = vector.broadcast %50 : vector<4x1x128xf32> to vector<4x8x128xf32>
    %52 = arith.subf %46, %51 : vector<4x8x128xf32>
    %53 = arith.mulf %52, %52 : vector<4x8x128xf32>
    %cst_37 = arith.constant dense<0.000000e+00> : vector<4x128xf32>
    %54 = vector.multi_reduction <add>, %53, %cst_37 [1] : vector<4x8x128xf32> to vector<4x128xf32>
    %55 = vector.shape_cast %54 : vector<4x128xf32> to vector<4x1x128xf32>
    %cst_38 = arith.constant 8.000000e+00 : f32
    %56 = vector.broadcast %cst_38 : f32 to vector<4x1x128xf32>
    %57 = arith.divf %55, %56 : vector<4x1x128xf32>
    %58 = vector.shape_cast %43 : vector<4x128xf32> to vector<4x1x128xf32>
    %cst_39 = arith.constant 9.99999974E-6 : f32
    %59 = vector.broadcast %cst_39 : f32 to vector<4x1x128xf32>
    %60 = arith.addf %57, %59 : vector<4x1x128xf32>
    %61 = math.rsqrt %60 : vector<4x1x128xf32>
    %62 = arith.mulf %58, %61 : vector<4x1x128xf32>
    %63 = vector.broadcast %62 : vector<4x1x128xf32> to vector<4x8x128xf32>
    %64 = arith.mulf %52, %63 : vector<4x8x128xf32>
    %65 = vector.shape_cast %45 : vector<4x128xf32> to vector<4x1x128xf32>
    %66 = vector.broadcast %65 : vector<4x1x128xf32> to vector<4x8x128xf32>
    %67 = arith.addf %64, %66 : vector<4x8x128xf32>
    %cst_40 = arith.constant 0.000000e+00 : f32
    %68 = vector.broadcast %cst_40 : f32 to vector<4x8x128xf32>
    %69 = arith.maximumf %67, %68 : vector<4x8x128xf32>
    %70 = vector.shape_cast %69 : vector<4x8x128xf32> to vector<32x128xf32>
    %cst_41 = arith.constant dense<0.000000e+00> : vector<32x256xf32>
    %71 = tpu.matmul %70, %6, %cst_41 {dimension_numbers = #tpu.dot_dimension_numbers<[1], [0], [0], [1], [0, 0, 1, 1], [], []>} : vector<32x128xf32>, vector<128x256xf32>, vector<32x256xf32> -> vector<32x256xf32>
    %c0_42 = arith.constant 0 : index
    %c0_43 = arith.constant 0 : index
    %c0_44 = arith.constant 0 : index
    %c384 = arith.constant 384 : index
    %72 = vector.load %arg3[%c0_42, %c0_43, %c0_44, %c384] : memref<2x2x4x640xf32, #tpu.memory_space<vmem>>, vector<1x1x4x256xf32>
    %73 = vector.shape_cast %72 : vector<1x1x4x256xf32> to vector<4x256xf32>
    %c0_45 = arith.constant 0 : index
    %c1_46 = arith.constant 1 : index
    %c0_47 = arith.constant 0 : index
    %c384_48 = arith.constant 384 : index
    %74 = vector.load %arg3[%c0_45, %c1_46, %c0_47, %c384_48] : memref<2x2x4x640xf32, #tpu.memory_space<vmem>>, vector<1x1x4x256xf32>
    %75 = vector.shape_cast %74 : vector<1x1x4x256xf32> to vector<4x256xf32>
    %76 = vector.shape_cast %71 : vector<32x256xf32> to vector<4x8x256xf32>
    %cst_49 = arith.constant dense<0.000000e+00> : vector<4x256xf32>
    %77 = vector.multi_reduction <add>, %76, %cst_49 [1] : vector<4x8x256xf32> to vector<4x256xf32>
    %78 = vector.shape_cast %77 : vector<4x256xf32> to vector<4x1x256xf32>
    %cst_50 = arith.constant 8.000000e+00 : f32
    %79 = vector.broadcast %cst_50 : f32 to vector<4x1x256xf32>
    %80 = arith.divf %78, %79 : vector<4x1x256xf32>
    %81 = vector.broadcast %80 : vector<4x1x256xf32> to vector<4x8x256xf32>
    %82 = arith.subf %76, %81 : vector<4x8x256xf32>
    %83 = arith.mulf %82, %82 : vector<4x8x256xf32>
    %cst_51 = arith.constant dense<0.000000e+00> : vector<4x256xf32>
    %84 = vector.multi_reduction <add>, %83, %cst_51 [1] : vector<4x8x256xf32> to vector<4x256xf32>
    %85 = vector.shape_cast %84 : vector<4x256xf32> to vector<4x1x256xf32>
    %cst_52 = arith.constant 8.000000e+00 : f32
    %86 = vector.broadcast %cst_52 : f32 to vector<4x1x256xf32>
    %87 = arith.divf %85, %86 : vector<4x1x256xf32>
    %88 = vector.shape_cast %73 : vector<4x256xf32> to vector<4x1x256xf32>
    %cst_53 = arith.constant 9.99999974E-6 : f32
    %89 = vector.broadcast %cst_53 : f32 to vector<4x1x256xf32>
    %90 = arith.addf %87, %89 : vector<4x1x256xf32>
    %91 = math.rsqrt %90 : vector<4x1x256xf32>
    %92 = arith.mulf %88, %91 : vector<4x1x256xf32>
    %93 = vector.broadcast %92 : vector<4x1x256xf32> to vector<4x8x256xf32>
    %94 = arith.mulf %82, %93 : vector<4x8x256xf32>
    %95 = vector.shape_cast %75 : vector<4x256xf32> to vector<4x1x256xf32>
    %96 = vector.broadcast %95 : vector<4x1x256xf32> to vector<4x8x256xf32>
    %97 = arith.addf %94, %96 : vector<4x8x256xf32>
    %cst_54 = arith.constant 0.000000e+00 : f32
    %98 = vector.broadcast %cst_54 : f32 to vector<4x8x256xf32>
    %99 = arith.maximumf %97, %98 : vector<4x8x256xf32>
    %100 = vector.shape_cast %99 : vector<4x8x256xf32> to vector<32x256xf32>
    %cst_55 = arith.constant dense<0.000000e+00> : vector<32x32xf32>
    %101 = tpu.matmul %100, %8, %cst_55 {dimension_numbers = #tpu.dot_dimension_numbers<[1], [0], [0], [1], [0, 0, 1, 1], [], []>} : vector<32x256xf32>, vector<256x32xf32>, vector<32x32xf32> -> vector<32x32xf32>
    %102 = vector.broadcast %10 : vector<1x32xf32> to vector<32x32xf32>
    %103 = arith.addf %101, %102 : vector<32x32xf32>
    %c0_56 = arith.constant 0 : index
    %c0_57 = arith.constant 0 : index
    %c0_58 = arith.constant 0 : index
    %104 = vector.load %arg4[%c0_56, %c0_57, %c0_58] : memref<2x32x32xf32, #tpu.memory_space<vmem>>, vector<1x32x32xf32>
    %105 = vector.shape_cast %104 : vector<1x32x32xf32> to vector<32x32xf32>
    %106 = vector.shape_cast %103 : vector<32x32xf32> to vector<1x32x32xf32>
    tpu.vector_store %arg4[%c0_56, %c0_57, %c0_58], %106 {strides = array<i32>} : memref<2x32x32xf32, #tpu.memory_space<vmem>>, vector<1x32x32xf32>,
    %c1_59 = arith.constant 1 : index
    %c128_60 = arith.constant 128 : index
    %c0_61 = arith.constant 0 : index
    %107 = vector.load %arg2[%c1_59, %c128_60, %c0_61] : memref<2x161x256xf32, #tpu.memory_space<vmem>>, vector<1x32x256xf32>
    %108 = vector.shape_cast %107 : vector<1x32x256xf32> to vector<32x256xf32>
    %c1_62 = arith.constant 1 : index
    %c0_63 = arith.constant 0 : index
    %c0_64 = arith.constant 0 : index
    %109 = vector.load %arg1[%c1_62, %c0_63, %c0_64] : memref<2x256x160xf32, #tpu.memory_space<vmem>>, vector<1x256x128xf32>
    %110 = vector.shape_cast %109 : vector<1x256x128xf32> to vector<256x128xf32>
    %c1_65 = arith.constant 1 : index
    %c0_66 = arith.constant 0 : index
    %c0_67 = arith.constant 0 : index
    %111 = vector.load %arg2[%c1_65, %c0_66, %c0_67] : memref<2x161x256xf32, #tpu.memory_space<vmem>>, vector<1x128x256xf32>
    %112 = vector.shape_cast %111 : vector<1x128x256xf32> to vector<128x256xf32>
    %c1_68 = arith.constant 1 : index
    %c0_69 = arith.constant 0 : index
    %c128_70 = arith.constant 128 : index
    %113 = vector.load %arg1[%c1_68, %c0_69, %c128_70] : memref<2x256x160xf32, #tpu.memory_space<vmem>>, vector<1x256x32xf32>
    %114 = vector.shape_cast %113 : vector<1x256x32xf32> to vector<256x32xf32>
    %c1_71 = arith.constant 1 : index
    %c160_72 = arith.constant 160 : index
    %c0_73 = arith.constant 0 : index
    %115 = vector.load %arg2[%c1_71, %c160_72, %c0_73] : memref<2x161x256xf32, #tpu.memory_space<vmem>>, vector<1x1x32xf32>
    %116 = vector.shape_cast %115 : vector<1x1x32xf32> to vector<1x32xf32>
    %cst_74 = arith.constant dense<0.000000e+00> : vector<32x256xf32>
    %117 = tpu.matmul %0, %108, %cst_74 {dimension_numbers = #tpu.dot_dimension_numbers<[1], [0], [0], [1], [0, 0, 1, 1], [], []>} : vector<32x32xf32>, vector<32x256xf32>, vector<32x256xf32> -> vector<32x256xf32>
    %c1_75 = arith.constant 1 : index
    %c0_76 = arith.constant 0 : index
    %c0_77 = arith.constant 0 : index
    %c0_78 = arith.constant 0 : index
    %118 = vector.load %arg3[%c1_75, %c0_76, %c0_77, %c0_78] : memref<2x2x4x640xf32, #tpu.memory_space<vmem>>, vector<1x1x4x256xf32>
    %119 = vector.shape_cast %118 : vector<1x1x4x256xf32> to vector<4x256xf32>
    %c1_79 = arith.constant 1 : index
    %c1_80 = arith.constant 1 : index
    %c0_81 = arith.constant 0 : index
    %c0_82 = arith.constant 0 : index
    %120 = vector.load %arg3[%c1_79, %c1_80, %c0_81, %c0_82] : memref<2x2x4x640xf32, #tpu.memory_space<vmem>>, vector<1x1x4x256xf32>
    %121 = vector.shape_cast %120 : vector<1x1x4x256xf32> to vector<4x256xf32>
    %122 = vector.shape_cast %117 : vector<32x256xf32> to vector<4x8x256xf32>
    %cst_83 = arith.constant dense<0.000000e+00> : vector<4x256xf32>
    %123 = vector.multi_reduction <add>, %122, %cst_83 [1] : vector<4x8x256xf32> to vector<4x256xf32>
    %124 = vector.shape_cast %123 : vector<4x256xf32> to vector<4x1x256xf32>
    %cst_84 = arith.constant 8.000000e+00 : f32
    %125 = vector.broadcast %cst_84 : f32 to vector<4x1x256xf32>
    %126 = arith.divf %124, %125 : vector<4x1x256xf32>
    %127 = vector.broadcast %126 : vector<4x1x256xf32> to vector<4x8x256xf32>
    %128 = arith.subf %122, %127 : vector<4x8x256xf32>
    %129 = arith.mulf %128, %128 : vector<4x8x256xf32>
    %cst_85 = arith.constant dense<0.000000e+00> : vector<4x256xf32>
    %130 = vector.multi_reduction <add>, %129, %cst_85 [1] : vector<4x8x256xf32> to vector<4x256xf32>
    %131 = vector.shape_cast %130 : vector<4x256xf32> to vector<4x1x256xf32>
    %cst_86 = arith.constant 8.000000e+00 : f32
    %132 = vector.broadcast %cst_86 : f32 to vector<4x1x256xf32>
    %133 = arith.divf %131, %132 : vector<4x1x256xf32>
    %134 = vector.shape_cast %119 : vector<4x256xf32> to vector<4x1x256xf32>
    %cst_87 = arith.constant 9.99999974E-6 : f32
    %135 = vector.broadcast %cst_87 : f32 to vector<4x1x256xf32>
    %136 = arith.addf %133, %135 : vector<4x1x256xf32>
    %137 = math.rsqrt %136 : vector<4x1x256xf32>
    %138 = arith.mulf %134, %137 : vector<4x1x256xf32>
    %139 = vector.broadcast %138 : vector<4x1x256xf32> to vector<4x8x256xf32>
    %140 = arith.mulf %128, %139 : vector<4x8x256xf32>
    %141 = vector.shape_cast %121 : vector<4x256xf32> to vector<4x1x256xf32>
    %142 = vector.broadcast %141 : vector<4x1x256xf32> to vector<4x8x256xf32>
    %143 = arith.addf %140, %142 : vector<4x8x256xf32>
    %cst_88 = arith.constant 0.000000e+00 : f32
    %144 = vector.broadcast %cst_88 : f32 to vector<4x8x256xf32>
    %145 = arith.maximumf %143, %144 : vector<4x8x256xf32>
    %146 = vector.shape_cast %145 : vector<4x8x256xf32> to vector<32x256xf32>
    %cst_89 = arith.constant dense<0.000000e+00> : vector<32x128xf32>
    %147 = tpu.matmul %146, %110, %cst_89 {dimension_numbers = #tpu.dot_dimension_numbers<[1], [0], [0], [1], [0, 0, 1, 1], [], []>} : vector<32x256xf32>, vector<256x128xf32>, vector<32x128xf32> -> vector<32x128xf32>
    %c1_90 = arith.constant 1 : index
    %c0_91 = arith.constant 0 : index
    %c0_92 = arith.constant 0 : index
    %c256_93 = arith.constant 256 : index
    %148 = vector.load %arg3[%c1_90, %c0_91, %c0_92, %c256_93] : memref<2x2x4x640xf32, #tpu.memory_space<vmem>>, vector<1x1x4x128xf32>
    %149 = vector.shape_cast %148 : vector<1x1x4x128xf32> to vector<4x128xf32>
    %c1_94 = arith.constant 1 : index
    %c1_95 = arith.constant 1 : index
    %c0_96 = arith.constant 0 : index
    %c256_97 = arith.constant 256 : index
    %150 = vector.load %arg3[%c1_94, %c1_95, %c0_96, %c256_97] : memref<2x2x4x640xf32, #tpu.memory_space<vmem>>, vector<1x1x4x128xf32>
    %151 = vector.shape_cast %150 : vector<1x1x4x128xf32> to vector<4x128xf32>
    %152 = vector.shape_cast %147 : vector<32x128xf32> to vector<4x8x128xf32>
    %cst_98 = arith.constant dense<0.000000e+00> : vector<4x128xf32>
    %153 = vector.multi_reduction <add>, %152, %cst_98 [1] : vector<4x8x128xf32> to vector<4x128xf32>
    %154 = vector.shape_cast %153 : vector<4x128xf32> to vector<4x1x128xf32>
    %cst_99 = arith.constant 8.000000e+00 : f32
    %155 = vector.broadcast %cst_99 : f32 to vector<4x1x128xf32>
    %156 = arith.divf %154, %155 : vector<4x1x128xf32>
    %157 = vector.broadcast %156 : vector<4x1x128xf32> to vector<4x8x128xf32>
    %158 = arith.subf %152, %157 : vector<4x8x128xf32>
    %159 = arith.mulf %158, %158 : vector<4x8x128xf32>
    %cst_100 = arith.constant dense<0.000000e+00> : vector<4x128xf32>
    %160 = vector.multi_reduction <add>, %159, %cst_100 [1] : vector<4x8x128xf32> to vector<4x128xf32>
    %161 = vector.shape_cast %160 : vector<4x128xf32> to vector<4x1x128xf32>
    %cst_101 = arith.constant 8.000000e+00 : f32
    %162 = vector.broadcast %cst_101 : f32 to vector<4x1x128xf32>
    %163 = arith.divf %161, %162 : vector<4x1x128xf32>
    %164 = vector.shape_cast %149 : vector<4x128xf32> to vector<4x1x128xf32>
    %cst_102 = arith.constant 9.99999974E-6 : f32
    %165 = vector.broadcast %cst_102 : f32 to vector<4x1x128xf32>
    %166 = arith.addf %163, %165 : vector<4x1x128xf32>
    %167 = math.rsqrt %166 : vector<4x1x128xf32>
    %168 = arith.mulf %164, %167 : vector<4x1x128xf32>
    %169 = vector.broadcast %168 : vector<4x1x128xf32> to vector<4x8x128xf32>
    %170 = arith.mulf %158, %169 : vector<4x8x128xf32>
    %171 = vector.shape_cast %151 : vector<4x128xf32> to vector<4x1x128xf32>
    %172 = vector.broadcast %171 : vector<4x1x128xf32> to vector<4x8x128xf32>
    %173 = arith.addf %170, %172 : vector<4x8x128xf32>
    %cst_103 = arith.constant 0.000000e+00 : f32
    %174 = vector.broadcast %cst_103 : f32 to vector<4x8x128xf32>
    %175 = arith.maximumf %173, %174 : vector<4x8x128xf32>
    %176 = vector.shape_cast %175 : vector<4x8x128xf32> to vector<32x128xf32>
    %cst_104 = arith.constant dense<0.000000e+00> : vector<32x256xf32>
    %177 = tpu.matmul %176, %112, %cst_104 {dimension_numbers = #tpu.dot_dimension_numbers<[1], [0], [0], [1], [0, 0, 1, 1], [], []>} : vector<32x128xf32>, vector<128x256xf32>, vector<32x256xf32> -> vector<32x256xf32>
    %c1_105 = arith.constant 1 : index
    %c0_106 = arith.constant 0 : index
    %c0_107 = arith.constant 0 : index
    %c384_108 = arith.constant 384 : index
    %178 = vector.load %arg3[%c1_105, %c0_106, %c0_107, %c384_108] : memref<2x2x4x640xf32, #tpu.memory_space<vmem>>, vector<1x1x4x256xf32>
    %179 = vector.shape_cast %178 : vector<1x1x4x256xf32> to vector<4x256xf32>
    %c1_109 = arith.constant 1 : index
    %c1_110 = arith.constant 1 : index
    %c0_111 = arith.constant 0 : index
    %c384_112 = arith.constant 384 : index
    %180 = vector.load %arg3[%c1_109, %c1_110, %c0_111, %c384_112] : memref<2x2x4x640xf32, #tpu.memory_space<vmem>>, vector<1x1x4x256xf32>
    %181 = vector.shape_cast %180 : vector<1x1x4x256xf32> to vector<4x256xf32>
    %182 = vector.shape_cast %177 : vector<32x256xf32> to vector<4x8x256xf32>
    %cst_113 = arith.constant dense<0.000000e+00> : vector<4x256xf32>
    %183 = vector.multi_reduction <add>, %182, %cst_113 [1] : vector<4x8x256xf32> to vector<4x256xf32>
    %184 = vector.shape_cast %183 : vector<4x256xf32> to vector<4x1x256xf32>
    %cst_114 = arith.constant 8.000000e+00 : f32
    %185 = vector.broadcast %cst_114 : f32 to vector<4x1x256xf32>
    %186 = arith.divf %184, %185 : vector<4x1x256xf32>
    %187 = vector.broadcast %186 : vector<4x1x256xf32> to vector<4x8x256xf32>
    %188 = arith.subf %182, %187 : vector<4x8x256xf32>
    %189 = arith.mulf %188, %188 : vector<4x8x256xf32>
    %cst_115 = arith.constant dense<0.000000e+00> : vector<4x256xf32>
    %190 = vector.multi_reduction <add>, %189, %cst_115 [1] : vector<4x8x256xf32> to vector<4x256xf32>
    %191 = vector.shape_cast %190 : vector<4x256xf32> to vector<4x1x256xf32>
    %cst_116 = arith.constant 8.000000e+00 : f32
    %192 = vector.broadcast %cst_116 : f32 to vector<4x1x256xf32>
    %193 = arith.divf %191, %192 : vector<4x1x256xf32>
    %194 = vector.shape_cast %179 : vector<4x256xf32> to vector<4x1x256xf32>
    %cst_117 = arith.constant 9.99999974E-6 : f32
    %195 = vector.broadcast %cst_117 : f32 to vector<4x1x256xf32>
    %196 = arith.addf %193, %195 : vector<4x1x256xf32>
    %197 = math.rsqrt %196 : vector<4x1x256xf32>
    %198 = arith.mulf %194, %197 : vector<4x1x256xf32>
    %199 = vector.broadcast %198 : vector<4x1x256xf32> to vector<4x8x256xf32>
    %200 = arith.mulf %188, %199 : vector<4x8x256xf32>
    %201 = vector.shape_cast %181 : vector<4x256xf32> to vector<4x1x256xf32>
    %202 = vector.broadcast %201 : vector<4x1x256xf32> to vector<4x8x256xf32>
    %203 = arith.addf %200, %202 : vector<4x8x256xf32>
    %cst_118 = arith.constant 0.000000e+00 : f32
    %204 = vector.broadcast %cst_118 : f32 to vector<4x8x256xf32>
    %205 = arith.maximumf %203, %204 : vector<4x8x256xf32>
    %206 = vector.shape_cast %205 : vector<4x8x256xf32> to vector<32x256xf32>
    %cst_119 = arith.constant dense<0.000000e+00> : vector<32x32xf32>
    %207 = tpu.matmul %206, %114, %cst_119 {dimension_numbers = #tpu.dot_dimension_numbers<[1], [0], [0], [1], [0, 0, 1, 1], [], []>} : vector<32x256xf32>, vector<256x32xf32>, vector<32x32xf32> -> vector<32x32xf32>
    %208 = vector.broadcast %116 : vector<1x32xf32> to vector<32x32xf32>
    %209 = arith.addf %207, %208 : vector<32x32xf32>
    %c1_120 = arith.constant 1 : index
    %c0_121 = arith.constant 0 : index
    %c0_122 = arith.constant 0 : index
    %210 = vector.load %arg4[%c1_120, %c0_121, %c0_122] : memref<2x32x32xf32, #tpu.memory_space<vmem>>, vector<1x32x32xf32>
    %211 = vector.shape_cast %210 : vector<1x32x32xf32> to vector<32x32xf32>
    %212 = vector.shape_cast %209 : vector<32x32xf32> to vector<1x32x32xf32>
    tpu.vector_store %arg4[%c1_120, %c0_121, %c0_122], %212 {strides = array<i32>} : memref<2x32x32xf32, #tpu.memory_space<vmem>>, vector<1x32x32xf32>,
    return
  }
}

</mosaic_0001>

<llo_original>
// kernel: mean_variance_regressor.1
$region0: #{mean_variance_regressor.1}
  #allocation0 [shape = 'u32[]', space=smem, size = 0x4, offset = 0x4, fixed_abs, tag = 'smem constant byte address 0x4 - core index']
  #allocation1 [shape = 'u32[72,128]{1,0:T(1,128)}', space=vmem, size = 0x9000, scoped, tag = 'internal scratch']
  %s0 = inlined_call_operand.vmem [shape: f32[32,32], index: 0, kind: input, shape index: {}]
  %s1 = inlined_call_operand.vmem [shape: f32[2,256,160], index: 1, kind: input, shape index: {}]
  %s2 = inlined_call_operand.vmem [shape: f32[2,161,256], index: 2, kind: input, shape index: {}]
  %s3 = inlined_call_operand.vmem [shape: f32[2,2,4,640], index: 3, kind: input, shape index: {}]
  %s4 = inlined_call_operand.vmem [shape: f32[2,32,32], index: 4, kind: output, shape index: {}]
  %s5 = sld [smem:[#allocation0]]
  $region26: #{mean_variance_regressor.1} parent=0
    _
  %s7 = ssub.s32 1, %s5
  %s8 = scalar_select 0, %s7, %s5
  // Predicated region
  $region2: #{mean_variance_regressor.1} parent=0 // pred_check
    _
  $region3: #{mean_variance_regressor.1} parent=0 // pred_check_branch
    %10 = sbr.rel (0) target = $region5
  $region4: #{mean_variance_regressor.1} parent=0 // pred_region
    _
  $region5: #{mean_variance_regressor.1} parent=0 // pred_fallthru
    _
  // Predicated region
  $region6: #{mean_variance_regressor.1} parent=0 // pred_check
    _
  $region7: #{mean_variance_regressor.1} parent=0 // pred_check_branch
    %12 = sbr.rel (0) target = $region9
  $region8: #{mean_variance_regressor.1} parent=0 // pred_region
    _
  $region9: #{mean_variance_regressor.1} parent=0 // pred_fallthru
    _
  // Predicated region
  $region10: #{mean_variance_regressor.1} parent=0 // pred_check
    _
  $region11: #{mean_variance_regressor.1} parent=0 // pred_check_branch
    %14 = sbr.rel (0) target = $region13
  $region12: #{mean_variance_regressor.1} parent=0 // pred_region
    _
  $region13: #{mean_variance_regressor.1} parent=0 // pred_fallthru
    _
  // Predicated region
  $region14: #{mean_variance_regressor.1} parent=0 // pred_check
    _
  $region15: #{mean_variance_regressor.1} parent=0 // pred_check_branch
    %16 = sbr.rel (0) target = $region17
  $region16: #{mean_variance_regressor.1} parent=0 // pred_region
    _
  $region17: #{mean_variance_regressor.1} parent=0 // pred_fallthru
    _
  %v17 = vld [vmem:[%s0] sm:$0xff]
  %v18 = vld [vmem:[%s0 + $0x8] sm:$0xff]
  %v19 = vld [vmem:[%s0 + $0x10] sm:$0xff]
  %v20 = vld [vmem:[%s0 + $0x18] sm:$0xff]
  %v21 = vld [vmem:[%s2 + $0x100] sm:$0xff]
  %v22 = vld [vmem:[%s2 + $0x108] sm:$0xff]
  %v23 = vld [vmem:[%s2 + $0x110] sm:$0xff]
  %v24 = vld [vmem:[%s2 + $0x118] sm:$0xff]
  %v25 = vld [vmem:[%s2 + $0x120] sm:$0xff]
  %v26 = vld [vmem:[%s2 + $0x128] sm:$0xff]
  %v27 = vld [vmem:[%s2 + $0x130] sm:$0xff]
  %v28 = vld [vmem:[%s2 + $0x138] sm:$0xff]
  %v29 = vld [vmem:[%s1] sm:$0xff]
  %v30 = vld [vmem:[%s1 + $0x10] sm:$0xff]
  %v31 = vld [vmem:[%s1 + $0x20] sm:$0xff]
  %v32 = vld [vmem:[%s1 + $0x30] sm:$0xff]
  %v33 = vld [vmem:[%s1 + $0x40] sm:$0xff]
  %v34 = vld [vmem:[%s1 + $0x50] sm:$0xff]
  %v35 = vld [vmem:[%s1 + $0x60] sm:$0xff]
  %v36 = vld [vmem:[%s1 + $0x70] sm:$0xff]
  %v37 = vld [vmem:[%s1 + $0x80] sm:$0xff]
  %v38 = vld [vmem:[%s1 + $0x90] sm:$0xff]
  %v39 = vld [vmem:[%s1 + $0xa0] sm:$0xff]
  %v40 = vld [vmem:[%s1 + $0xb0] sm:$0xff]
  %v41 = vld [vmem:[%s1 + $0xc0] sm:$0xff]
  %v42 = vld [vmem:[%s1 + $0xd0] sm:$0xff]
  %v43 = vld [vmem:[%s1 + $0xe0] sm:$0xff]
  %v44 = vld [vmem:[%s1 + $0xf0] sm:$0xff]
  %v45 = vld [vmem:[%s1 + $0x100] sm:$0xff]
  %v46 = vld [vmem:[%s1 + $0x110] sm:$0xff]
  %v47 = vld [vmem:[%s1 + $0x120] sm:$0xff]
  %v48 = vld [vmem:[%s1 + $0x130] sm:$0xff]
  %v49 = vld [vmem:[%s1 + $0x140] sm:$0xff]
  %v50 = vld [vmem:[%s1 + $0x150] sm:$0xff]
  %v51 = vld [vmem:[%s1 + $0x160] sm:$0xff]
  %v52 = vld [vmem:[%s1 + $0x170] sm:$0xff]
  %v53 = vld [vmem:[%s1 + $0x180] sm:$0xff]
  %v54 = vld [vmem:[%s1 + $0x190] sm:$0xff]
  %v55 = vld [vmem:[%s1 + $0x1a0] sm:$0xff]
  %v56 = vld [vmem:[%s1 + $0x1b0] sm:$0xff]
  %v57 = vld [vmem:[%s1 + $0x1c0] sm:$0xff]
  %v58 = vld [vmem:[%s1 + $0x1d0] sm:$0xff]
  %v59 = vld [vmem:[%s1 + $0x1e0] sm:$0xff]
  %v60 = vld [vmem:[%s1 + $0x1f0] sm:$0xff]
  %v61 = vld [vmem:[%s2] sm:$0xff]
  %v62 = vld [vmem:[%s2 + $0x8] sm:$0xff]
  %v63 = vld [vmem:[%s2 + $0x10] sm:$0xff]
  %v64 = vld [vmem:[%s2 + $0x18] sm:$0xff]
  %v65 = vld [vmem:[%s2 + $0x20] sm:$0xff]
  %v66 = vld [vmem:[%s2 + $0x28] sm:$0xff]
  %v67 = vld [vmem:[%s2 + $0x30] sm:$0xff]
  %v68 = vld [vmem:[%s2 + $0x38] sm:$0xff]
  %v69 = vld [vmem:[%s2 + $0x40] sm:$0xff]
  %v70 = vld [vmem:[%s2 + $0x48] sm:$0xff]
  %v71 = vld [vmem:[%s2 + $0x50] sm:$0xff]
  %v72 = vld [vmem:[%s2 + $0x58] sm:$0xff]
  %v73 = vld [vmem:[%s2 + $0x60] sm:$0xff]
  %v74 = vld [vmem:[%s2 + $0x68] sm:$0xff]
  %v75 = vld [vmem:[%s2 + $0x70] sm:$0xff]
  %v76 = vld [vmem:[%s2 + $0x78] sm:$0xff]
  %v77 = vld [vmem:[%s2 + $0x80] sm:$0xff]
  %v78 = vld [vmem:[%s2 + $0x88] sm:$0xff]
  %v79 = vld [vmem:[%s2 + $0x90] sm:$0xff]
  %v80 = vld [vmem:[%s2 + $0x98] sm:$0xff]
  %v81 = vld [vmem:[%s2 + $0xa0] sm:$0xff]
  %v82 = vld [vmem:[%s2 + $0xa8] sm:$0xff]
  %v83 = vld [vmem:[%s2 + $0xb0] sm:$0xff]
  %v84 = vld [vmem:[%s2 + $0xb8] sm:$0xff]
  %v85 = vld [vmem:[%s2 + $0xc0] sm:$0xff]
  %v86 = vld [vmem:[%s2 + $0xc8] sm:$0xff]
  %v87 = vld [vmem:[%s2 + $0xd0] sm:$0xff]
  %v88 = vld [vmem:[%s2 + $0xd8] sm:$0xff]
  %v89 = vld [vmem:[%s2 + $0xe0] sm:$0xff]
  %v90 = vld [vmem:[%s2 + $0xe8] sm:$0xff]
  %v91 = vld [vmem:[%s2 + $0xf0] sm:$0xff]
  %v92 = vld [vmem:[%s2 + $0xf8] sm:$0xff]
  %v93 = vld [vmem:[%s1 + $0x8] sm:$0xff]
  %v94 = vld [vmem:[%s1 + $0x18] sm:$0xff]
  %v95 = vld [vmem:[%s1 + $0x28] sm:$0xff]
  %v96 = vld [vmem:[%s1 + $0x38] sm:$0xff]
  %v97 = vld [vmem:[%s1 + $0x48] sm:$0xff]
  %v98 = vld [vmem:[%s1 + $0x58] sm:$0xff]
  %v99 = vld [vmem:[%s1 + $0x68] sm:$0xff]
  %v100 = vld [vmem:[%s1 + $0x78] sm:$0xff]
  %v101 = vld [vmem:[%s1 + $0x88] sm:$0xff]
  %v102 = vld [vmem:[%s1 + $0x98] sm:$0xff]
  %v103 = vld [vmem:[%s1 + $0xa8] sm:$0xff]
  %v104 = vld [vmem:[%s1 + $0xb8] sm:$0xff]
  %v105 = vld [vmem:[%s1 + $0xc8] sm:$0xff]
  %v106 = vld [vmem:[%s1 + $0xd8] sm:$0xff]
  %v107 = vld [vmem:[%s1 + $0xe8] sm:$0xff]
  %v108 = vld [vmem:[%s1 + $0xf8] sm:$0xff]
  %v109 = vld [vmem:[%s1 + $0x108] sm:$0xff]
  %v110 = vld [vmem:[%s1 + $0x118] sm:$0xff]
  %v111 = vld [vmem:[%s1 + $0x128] sm:$0xff]
  %v112 = vld [vmem:[%s1 + $0x138] sm:$0xff]
  %v113 = vld [vmem:[%s1 + $0x148] sm:$0xff]
  %v114 = vld [vmem:[%s1 + $0x158] sm:$0xff]
  %v115 = vld [vmem:[%s1 + $0x168] sm:$0xff]
  %v116 = vld [vmem:[%s1 + $0x178] sm:$0xff]
  %v117 = vld [vmem:[%s1 + $0x188] sm:$0xff]
  %v118 = vld [vmem:[%s1 + $0x198] sm:$0xff]
  %v119 = vld [vmem:[%s1 + $0x1a8] sm:$0xff]
  %v120 = vld [vmem:[%s1 + $0x1b8] sm:$0xff]
  %v121 = vld [vmem:[%s1 + $0x1c8] sm:$0xff]
  %v122 = vld [vmem:[%s1 + $0x1d8] sm:$0xff]
  %v123 = vld [vmem:[%s1 + $0x1e8] sm:$0xff]
  %v124 = vld [vmem:[%s1 + $0x1f8] sm:$0xff]
  %v125 = vld [vmem:[%s2 + $0x140] ss:$0 sm:$0xff]
  %vm126 = vcmask 261120
  %v128 = vsel %vm126, %v17, 0
  %v131 = vsel %vm126, %v18, 0
  %v134 = vsel %vm126, %v19, 0
  %v137 = vsel %vm126, %v20, 0
  %139 = vmatpush.msra.mxu0 0.0
  %140 = vmatpush.msra.mxu0 0.0
  %141 = vmatpush.msra.mxu0 0.0
  %142 = vmatpush.msra.mxu0 0.0
  %143 = vmatpush.msra.mxu0 0.0
  %144 = vmatpush.msra.mxu0 0.0
  %145 = vmatpush.msra.mxu0 0.0
  %146 = vmatpush.msra.mxu0 0.0
  %147 = vmatpush.msra.mxu0 0.0
  %148 = vmatpush.msra.mxu0 0.0
  %149 = vmatpush.msra.mxu0 0.0
  %150 = vmatpush.msra.mxu0 0.0
  %151 = vmatpush.msra.mxu0 %v27
  %152 = vmatpush.msra.mxu0 %v25
  %153 = vmatpush.msra.mxu0 %v23
  %154 = vmatpush.msra.mxu0 %v21
  %155 = vmatmul.f32.gmra.mxu0 %v128
  %v156 = vpop.f32.mrf.mxu0
  %v157 = vadd.f32 0.0, %v156
  %158 = vmatmul.f32.gmra.mxu0 %v131
  %v159 = vpop.f32.mrf.mxu0
  %v160 = vadd.f32 0.0, %v159
  %161 = vmatmul.f32.gmra.mxu0 %v134
  %v162 = vpop.f32.mrf.mxu0
  %v163 = vadd.f32 0.0, %v162
  %164 = vmatmul.f32.gmra.mxu0 %v137
  %v165 = vpop.f32.mrf.mxu0
  %v166 = vadd.f32 0.0, %v165
  %167 = vdwg.mxu0
  %168 = vmatpush.msra.mxu0 0.0
  %169 = vmatpush.msra.mxu0 0.0
  %170 = vmatpush.msra.mxu0 0.0
  %171 = vmatpush.msra.mxu0 0.0
  %172 = vmatpush.msra.mxu0 0.0
  %173 = vmatpush.msra.mxu0 0.0
  %174 = vmatpush.msra.mxu0 0.0
  %175 = vmatpush.msra.mxu0 0.0
  %176 = vmatpush.msra.mxu0 0.0
  %177 = vmatpush.msra.mxu0 0.0
  %178 = vmatpush.msra.mxu0 0.0
  %179 = vmatpush.msra.mxu0 0.0
  %180 = vmatpush.msra.mxu0 %v28
  %181 = vmatpush.msra.mxu0 %v26
  %182 = vmatpush.msra.mxu0 %v24
  %183 = vmatpush.msra.mxu0 %v22
  %184 = vmatmul.f32.gmra.mxu0 %v128
  %v185 = vpop.f32.mrf.mxu0
  %v186 = vadd.f32 0.0, %v185
  %187 = vmatmul.f32.gmra.mxu0 %v131
  %v188 = vpop.f32.mrf.mxu0
  %v189 = vadd.f32 0.0, %v188
  %190 = vmatmul.f32.gmra.mxu0 %v134
  %v191 = vpop.f32.mrf.mxu0
  %v192 = vadd.f32 0.0, %v191
  %193 = vmatmul.f32.gmra.mxu0 %v137
  %v194 = vpop.f32.mrf.mxu0
  %v195 = vadd.f32 0.0, %v194
  %196 = vdwg.mxu0
  %v197 = vld [vmem:[%s3] sm:$0xff]
  %s198 = scalar_lea.vmem %s3, 20
  %v199 = vld [vmem:[%s198] sm:$0xff]
  %v200 = vrot.slane %v157, 4
  %v201 = vadd.f32 %v157, %v200
  %v202 = vrot.slane %v201, 2
  %v203 = vadd.f32 %v201, %v202
  %v204 = vrot.slane %v203, 1
  %v205 = vadd.f32 %v203, %v204
  %v206 = vrot.slane %v186, 4
  %v207 = vadd.f32 %v186, %v206
  %v208 = vrot.slane %v207, 2
  %v209 = vadd.f32 %v207, %v208
  %v210 = vrot.slane %v209, 1
  %v211 = vadd.f32 %v209, %v210
  %v212 = vrot.slane %v160, 4
  %v213 = vadd.f32 %v160, %v212
  %v214 = vrot.slane %v213, 2
  %v215 = vadd.f32 %v213, %v214
  %v216 = vrot.slane %v215, 1
  %v217 = vadd.f32 %v215, %v216
  %v218 = vrot.slane %v189, 4
  %v219 = vadd.f32 %v189, %v218
  %v220 = vrot.slane %v219, 2
  %v221 = vadd.f32 %v219, %v220
  %v222 = vrot.slane %v221, 1
  %v223 = vadd.f32 %v221, %v222
  %v224 = vrot.slane %v163, 4
  %v225 = vadd.f32 %v163, %v224
  %v226 = vrot.slane %v225, 2
  %v227 = vadd.f32 %v225, %v226
  %v228 = vrot.slane %v227, 1
  %v229 = vadd.f32 %v227, %v228
  %v230 = vrot.slane %v192, 4
  %v231 = vadd.f32 %v192, %v230
  %v232 = vrot.slane %v231, 2
  %v233 = vadd.f32 %v231, %v232
  %v234 = vrot.slane %v233, 1
  %v235 = vadd.f32 %v233, %v234
  %v236 = vrot.slane %v166, 4
  %v237 = vadd.f32 %v166, %v236
  %v238 = vrot.slane %v237, 2
  %v239 = vadd.f32 %v237, %v238
  %v240 = vrot.slane %v239, 1
  %v241 = vadd.f32 %v239, %v240
  %v242 = vrot.slane %v195, 4
  %v243 = vadd.f32 %v195, %v242
  %v244 = vrot.slane %v243, 2
  %v245 = vadd.f32 %v243, %v244
  %v246 = vrot.slane %v245, 1
  %v247 = vadd.f32 %v245, %v246
  %v248 = vrcp.pop 8.0
  %v249 = vmul.f32 8.0, %v248
  %v250 = vsub.f32 1.0, %v249
  %v251 = vmul.f32 %v248, %v250
  %v252 = vadd.f32 %v248, %v251
  %vm253 = vweird.f32 %v248
  %v254 = vsel %vm253, %v248, %v252
  %v255 = vmul.f32 %v205, %v254
  %v256 = vmul.f32 %v211, %v254
  %v257 = vmul.f32 %v217, %v254
  %v258 = vmul.f32 %v223, %v254
  %v259 = vmul.f32 %v229, %v254
  %v260 = vmul.f32 %v235, %v254
  %v261 = vmul.f32 %v241, %v254
  %v262 = vmul.f32 %v247, %v254
  %v263 = vsub.f32 %v157, %v255
  %v264 = vsub.f32 %v186, %v256
  %v265 = vsub.f32 %v160, %v257
  %v266 = vsub.f32 %v189, %v258
  %v267 = vsub.f32 %v163, %v259
  %v268 = vsub.f32 %v192, %v260
  %v269 = vsub.f32 %v166, %v261
  %v270 = vsub.f32 %v195, %v262
  %v271 = vmul.f32 %v263, %v263
  %v272 = vmul.f32 %v264, %v264
  %v273 = vmul.f32 %v265, %v265
  %v274 = vmul.f32 %v266, %v266
  %v275 = vmul.f32 %v267, %v267
  %v276 = vmul.f32 %v268, %v268
  %v277 = vmul.f32 %v269, %v269
  %v278 = vmul.f32 %v270, %v270
  %v279 = vrot.slane %v271, 4
  %v280 = vadd.f32 %v271, %v279
  %v281 = vrot.slane %v280, 2
  %v282 = vadd.f32 %v280, %v281
  %v283 = vrot.slane %v282, 1
  %v284 = vadd.f32 %v282, %v283
  %v285 = vrot.slane %v272, 4
  %v286 = vadd.f32 %v272, %v285
  %v287 = vrot.slane %v286, 2
  %v288 = vadd.f32 %v286, %v287
  %v289 = vrot.slane %v288, 1
  %v290 = vadd.f32 %v288, %v289
  %v291 = vrot.slane %v273, 4
  %v292 = vadd.f32 %v273, %v291
  %v293 = vrot.slane %v292, 2
  %v294 = vadd.f32 %v292, %v293
  %v295 = vrot.slane %v294, 1
  %v296 = vadd.f32 %v294, %v295
  %v297 = vrot.slane %v274, 4
  %v298 = vadd.f32 %v274, %v297
  %v299 = vrot.slane %v298, 2
  %v300 = vadd.f32 %v298, %v299
  %v301 = vrot.slane %v300, 1
  %v302 = vadd.f32 %v300, %v301
  %v303 = vrot.slane %v275, 4
  %v304 = vadd.f32 %v275, %v303
  %v305 = vrot.slane %v304, 2
  %v306 = vadd.f32 %v304, %v305
  %v307 = vrot.slane %v306, 1
  %v308 = vadd.f32 %v306, %v307
  %v309 = vrot.slane %v276, 4
  %v310 = vadd.f32 %v276, %v309
  %v311 = vrot.slane %v310, 2
  %v312 = vadd.f32 %v310, %v311
  %v313 = vrot.slane %v312, 1
  %v314 = vadd.f32 %v312, %v313
  %v315 = vrot.slane %v277, 4
  %v316 = vadd.f32 %v277, %v315
  %v317 = vrot.slane %v316, 2
  %v318 = vadd.f32 %v316, %v317
  %v319 = vrot.slane %v318, 1
  %v320 = vadd.f32 %v318, %v319
  %v321 = vrot.slane %v278, 4
  %v322 = vadd.f32 %v278, %v321
  %v323 = vrot.slane %v322, 2
  %v324 = vadd.f32 %v322, %v323
  %v325 = vrot.slane %v324, 1
  %v326 = vadd.f32 %v324, %v325
  %v327 = vmul.f32 %v284, %v254
  %v328 = vmul.f32 %v290, %v254
  %v329 = vmul.f32 %v296, %v254
  %v330 = vmul.f32 %v302, %v254
  %v331 = vmul.f32 %v308, %v254
  %v332 = vmul.f32 %v314, %v254
  %v333 = vmul.f32 %v320, %v254
  %v334 = vmul.f32 %v326, %v254
  %v336 = vrot.slane %v197, 3
  %vm337 = vcmask 1040384
  %v338 = vsel %vm337, %v197, %v336
  %vm339 = vcmask 1041409
  %v340 = vsel %vm339, %v197, %v336
  %v341 = vrot.slane %v340, 1
  %vm342 = vcmask 1042434
  %v343 = vsel %vm342, %v197, %v336
  %v344 = vrot.slane %v343, 2
  %vm345 = vcmask 1043459
  %v346 = vsel %vm345, %v197, %v336
  %v347 = vrot.slane %v346, 3
  %v352 = vadd.f32 %v327, 1e-05
  %v353 = vadd.f32 %v328, 1e-05
  %v354 = vadd.f32 %v329, 1e-05
  %v355 = vadd.f32 %v330, 1e-05
  %v356 = vadd.f32 %v331, 1e-05
  %v357 = vadd.f32 %v332, 1e-05
  %v358 = vadd.f32 %v333, 1e-05
  %v359 = vadd.f32 %v334, 1e-05
  %v360 = vrsqrt.pop %v352
  %v361 = vmul.f32 %v360, %v352
  %v362 = vmul.f32 %v361, %v360
  %v363 = vmul.f32 0.5, %v362
  %v364 = vsub.f32 1.5, %v363
  %v365 = vmul.f32 %v360, %v364
  %vm366 = vweird.f32 %v352
  %vm367 = vweird.f32 %v360
  %vm368 = vmor %vm366, %vm367
  %v369 = vsel %vm368, %v360, %v365
  %v370 = vrsqrt.pop %v353
  %v371 = vmul.f32 %v370, %v353
  %v372 = vmul.f32 %v371, %v370
  %v373 = vmul.f32 0.5, %v372
  %v374 = vsub.f32 1.5, %v373
  %v375 = vmul.f32 %v370, %v374
  %vm376 = vweird.f32 %v353
  %vm377 = vweird.f32 %v370
  %vm378 = vmor %vm376, %vm377
  %v379 = vsel %vm378, %v370, %v375
  %v380 = vrsqrt.pop %v354
  %v381 = vmul.f32 %v380, %v354
  %v382 = vmul.f32 %v381, %v380
  %v383 = vmul.f32 0.5, %v382
  %v384 = vsub.f32 1.5, %v383
  %v385 = vmul.f32 %v380, %v384
  %vm386 = vweird.f32 %v354
  %vm387 = vweird.f32 %v380
  %vm388 = vmor %vm386, %vm387
  %v389 = vsel %vm388, %v380, %v385
  %v390 = vrsqrt.pop %v355
  %v391 = vmul.f32 %v390, %v355
  %v392 = vmul.f32 %v391, %v390
  %v393 = vmul.f32 0.5, %v392
  %v394 = vsub.f32 1.5, %v393
  %v395 = vmul.f32 %v390, %v394
  %vm396 = vweird.f32 %v355
  %vm397 = vweird.f32 %v390
  %vm398 = vmor %vm396, %vm397
  %v399 = vsel %vm398, %v390, %v395
  %v400 = vrsqrt.pop %v356
  %v401 = vmul.f32 %v400, %v356
  %v402 = vmul.f32 %v401, %v400
  %v403 = vmul.f32 0.5, %v402
  %v404 = vsub.f32 1.5, %v403
  %v405 = vmul.f32 %v400, %v404
  %vm406 = vweird.f32 %v356
  %vm407 = vweird.f32 %v400
  %vm408 = vmor %vm406, %vm407
  %v409 = vsel %vm408, %v400, %v405
  %v410 = vrsqrt.pop %v357
  %v411 = vmul.f32 %v410, %v357
  %v412 = vmul.f32 %v411, %v410
  %v413 = vmul.f32 0.5, %v412
  %v414 = vsub.f32 1.5, %v413
  %v415 = vmul.f32 %v410, %v414
  %vm416 = vweird.f32 %v357
  %vm417 = vweird.f32 %v410
  %vm418 = vmor %vm416, %vm417
  %v419 = vsel %vm418, %v410, %v415
  %v420 = vrsqrt.pop %v358
  %v421 = vmul.f32 %v420, %v358
  %v422 = vmul.f32 %v421, %v420
  %v423 = vmul.f32 0.5, %v422
  %v424 = vsub.f32 1.5, %v423
  %v425 = vmul.f32 %v420, %v424
  %vm426 = vweird.f32 %v358
  %vm427 = vweird.f32 %v420
  %vm428 = vmor %vm426, %vm427
  %v429 = vsel %vm428, %v420, %v425
  %v430 = vrsqrt.pop %v359
  %v431 = vmul.f32 %v430, %v359
  %v432 = vmul.f32 %v431, %v430
  %v433 = vmul.f32 0.5, %v432
  %v434 = vsub.f32 1.5, %v433
  %v435 = vmul.f32 %v430, %v434
  %vm436 = vweird.f32 %v359
  %vm437 = vweird.f32 %v430
  %vm438 = vmor %vm436, %vm437
  %v439 = vsel %vm438, %v430, %v435
  %v448 = vrot.slane %v379, 7
  %v449 = vrot.slane %v399, 7
  %v450 = vrot.slane %v419, 7
  %v451 = vrot.slane %v439, 7
  %v452 = vsel %vm337, %v369, %v448
  %v453 = vsel %vm337, %v389, %v449
  %v454 = vsel %vm337, %v409, %v450
  %v455 = vsel %vm337, %v429, %v451
  %v460 = vmul.f32 %v338, %v452
  %v461 = vmul.f32 %v341, %v453
  %v462 = vmul.f32 %v344, %v454
  %v463 = vmul.f32 %v347, %v455
  %v468 = vperm.slane %v460, 0
  %v469 = vperm.slane %v460, 1
  %v470 = vperm.slane %v461, 0
  %v471 = vperm.slane %v461, 1
  %v472 = vperm.slane %v462, 0
  %v473 = vperm.slane %v462, 1
  %v474 = vperm.slane %v463, 0
  %v475 = vperm.slane %v463, 1
  %v484 = vmul.f32 %v263, %v468
  %v485 = vmul.f32 %v264, %v469
  %v486 = vmul.f32 %v265, %v470
  %v487 = vmul.f32 %v266, %v471
  %v488 = vmul.f32 %v267, %v472
  %v489 = vmul.f32 %v268, %v473
  %v490 = vmul.f32 %v269, %v474
  %v491 = vmul.f32 %v270, %v475
  %v493 = vrot.slane %v199, 3
  %v494 = vsel %vm337, %v199, %v493
  %v495 = vsel %vm339, %v199, %v493
  %v496 = vrot.slane %v495, 1
  %v497 = vsel %vm342, %v199, %v493
  %v498 = vrot.slane %v497, 2
  %v499 = vsel %vm345, %v199, %v493
  %v500 = vrot.slane %v499, 3
  %v501 = vperm.slane %v494, 0
  %v502 = vperm.slane %v494, 1
  %v503 = vperm.slane %v496, 0
  %v504 = vperm.slane %v496, 1
  %v505 = vperm.slane %v498, 0
  %v506 = vperm.slane %v498, 1
  %v507 = vperm.slane %v500, 0
  %v508 = vperm.slane %v500, 1
  %v517 = vadd.f32 %v484, %v501
  %v518 = vadd.f32 %v485, %v502
  %v519 = vadd.f32 %v486, %v503
  %v520 = vadd.f32 %v487, %v504
  %v521 = vadd.f32 %v488, %v505
  %v522 = vadd.f32 %v489, %v506
  %v523 = vadd.f32 %v490, %v507
  %v524 = vadd.f32 %v491, %v508
  %v525 = vmax.f32 %v517, 0.0
  %v526 = vmax.f32 %v518, 0.0
  %v527 = vmax.f32 %v519, 0.0
  %v528 = vmax.f32 %v520, 0.0
  %v529 = vmax.f32 %v521, 0.0
  %v530 = vmax.f32 %v522, 0.0
  %v531 = vmax.f32 %v523, 0.0
  %v532 = vmax.f32 %v524, 0.0
  %533 = vmatpush.msra.mxu0 %v44
  %534 = vmatpush.msra.mxu0 %v43
  %535 = vmatpush.msra.mxu0 %v42
  %536 = vmatpush.msra.mxu0 %v41
  %537 = vmatpush.msra.mxu0 %v40
  %538 = vmatpush.msra.mxu0 %v39
  %539 = vmatpush.msra.mxu0 %v38
  %540 = vmatpush.msra.mxu0 %v37
  %541 = vmatpush.msra.mxu0 %v36
  %542 = vmatpush.msra.mxu0 %v35
  %543 = vmatpush.msra.mxu0 %v34
  %544 = vmatpush.msra.mxu0 %v33
  %545 = vmatpush.msra.mxu0 %v32
  %546 = vmatpush.msra.mxu0 %v31
  %547 = vmatpush.msra.mxu0 %v30
  %548 = vmatpush.msra.mxu0 %v29
  %549 = vmatmul.f32.gmra.mxu0 %v525
  %v550 = vpop.f32.mrf.mxu0
  %v551 = vadd.f32 0.0, %v550
  %552 = vmatmul.f32.gmra.mxu0 %v527
  %v553 = vpop.f32.mrf.mxu0
  %v554 = vadd.f32 0.0, %v553
  %555 = vmatmul.f32.gmra.mxu0 %v529
  %v556 = vpop.f32.mrf.mxu0
  %v557 = vadd.f32 0.0, %v556
  %558 = vmatmul.f32.gmra.mxu0 %v531
  %v559 = vpop.f32.mrf.mxu0
  %v560 = vadd.f32 0.0, %v559
  %561 = vdwg.mxu0
  %562 = vmatpush.msra.mxu0 %v60
  %563 = vmatpush.msra.mxu0 %v59
  %564 = vmatpush.msra.mxu0 %v58
  %565 = vmatpush.msra.mxu0 %v57
  %566 = vmatpush.msra.mxu0 %v56
  %567 = vmatpush.msra.mxu0 %v55
  %568 = vmatpush.msra.mxu0 %v54
  %569 = vmatpush.msra.mxu0 %v53
  %570 = vmatpush.msra.mxu0 %v52
  %571 = vmatpush.msra.mxu0 %v51
  %572 = vmatpush.msra.mxu0 %v50
  %573 = vmatpush.msra.mxu0 %v49
  %574 = vmatpush.msra.mxu0 %v48
  %575 = vmatpush.msra.mxu0 %v47
  %576 = vmatpush.msra.mxu0 %v46
  %577 = vmatpush.msra.mxu0 %v45
  %578 = vmatmul.f32.gmra.mxu0 %v526
  %v579 = vpop.f32.mrf.mxu0
  %v580 = vadd.f32 %v551, %v579
  %581 = vmatmul.f32.gmra.mxu0 %v528
  %v582 = vpop.f32.mrf.mxu0
  %v583 = vadd.f32 %v554, %v582
  %584 = vmatmul.f32.gmra.mxu0 %v530
  %v585 = vpop.f32.mrf.mxu0
  %v586 = vadd.f32 %v557, %v585
  %587 = vmatmul.f32.gmra.mxu0 %v532
  %v588 = vpop.f32.mrf.mxu0
  %v589 = vadd.f32 %v560, %v588
  %590 = vdwg.mxu0
  %v591 = vld [vmem:[%s3 + $0x8] sm:$0xf]
  %v592 = vld [vmem:[%s198 + $0x8] sm:$0xf]
  %v593 = vrot.slane %v580, 4
  %v594 = vadd.f32 %v580, %v593
  %v595 = vrot.slane %v594, 2
  %v596 = vadd.f32 %v594, %v595
  %v597 = vrot.slane %v596, 1
  %v598 = vadd.f32 %v596, %v597
  %v599 = vrot.slane %v583, 4
  %v600 = vadd.f32 %v583, %v599
  %v601 = vrot.slane %v600, 2
  %v602 = vadd.f32 %v600, %v601
  %v603 = vrot.slane %v602, 1
  %v604 = vadd.f32 %v602, %v603
  %v605 = vrot.slane %v586, 4
  %v606 = vadd.f32 %v586, %v605
  %v607 = vrot.slane %v606, 2
  %v608 = vadd.f32 %v606, %v607
  %v609 = vrot.slane %v608, 1
  %v610 = vadd.f32 %v608, %v609
  %v611 = vrot.slane %v589, 4
  %v612 = vadd.f32 %v589, %v611
  %v613 = vrot.slane %v612, 2
  %v614 = vadd.f32 %v612, %v613
  %v615 = vrot.slane %v614, 1
  %v616 = vadd.f32 %v614, %v615
  %v617 = vmul.f32 %v598, %v254
  %v618 = vmul.f32 %v604, %v254
  %v619 = vmul.f32 %v610, %v254
  %v620 = vmul.f32 %v616, %v254
  %v621 = vsub.f32 %v580, %v617
  %v622 = vsub.f32 %v583, %v618
  %v623 = vsub.f32 %v586, %v619
  %v624 = vsub.f32 %v589, %v620
  %v625 = vmul.f32 %v621, %v621
  %v626 = vmul.f32 %v622, %v622
  %v627 = vmul.f32 %v623, %v623
  %v628 = vmul.f32 %v624, %v624
  %v629 = vrot.slane %v625, 4
  %v630 = vadd.f32 %v625, %v629
  %v631 = vrot.slane %v630, 2
  %v632 = vadd.f32 %v630, %v631
  %v633 = vrot.slane %v632, 1
  %v634 = vadd.f32 %v632, %v633
  %v635 = vrot.slane %v626, 4
  %v636 = vadd.f32 %v626, %v635
  %v637 = vrot.slane %v636, 2
  %v638 = vadd.f32 %v636, %v637
  %v639 = vrot.slane %v638, 1
  %v640 = vadd.f32 %v638, %v639
  %v641 = vrot.slane %v627, 4
  %v642 = vadd.f32 %v627, %v641
  %v643 = vrot.slane %v642, 2
  %v644 = vadd.f32 %v642, %v643
  %v645 = vrot.slane %v644, 1
  %v646 = vadd.f32 %v644, %v645
  %v647 = vrot.slane %v628, 4
  %v648 = vadd.f32 %v628, %v647
  %v649 = vrot.slane %v648, 2
  %v650 = vadd.f32 %v648, %v649
  %v651 = vrot.slane %v650, 1
  %v652 = vadd.f32 %v650, %v651
  %v653 = vmul.f32 %v634, %v254
  %v654 = vmul.f32 %v640, %v254
  %v655 = vmul.f32 %v646, %v254
  %v656 = vmul.f32 %v652, %v254
  %v658 = vrot.slane %v591, 3
  %v659 = vsel %vm337, %v591, %v658
  %v660 = vsel %vm339, %v591, %v658
  %v661 = vrot.slane %v660, 1
  %v662 = vsel %vm342, %v591, %v658
  %v663 = vrot.slane %v662, 2
  %v664 = vsel %vm345, %v591, %v658
  %v665 = vrot.slane %v664, 3
  %v670 = vadd.f32 %v653, 1e-05
  %v671 = vadd.f32 %v654, 1e-05
  %v672 = vadd.f32 %v655, 1e-05
  %v673 = vadd.f32 %v656, 1e-05
  %v674 = vrsqrt.pop %v670
  %v675 = vmul.f32 %v674, %v670
  %v676 = vmul.f32 %v675, %v674
  %v677 = vmul.f32 0.5, %v676
  %v678 = vsub.f32 1.5, %v677
  %v679 = vmul.f32 %v674, %v678
  %vm680 = vweird.f32 %v670
  %vm681 = vweird.f32 %v674
  %vm682 = vmor %vm680, %vm681
  %v683 = vsel %vm682, %v674, %v679
  %v684 = vrsqrt.pop %v671
  %v685 = vmul.f32 %v684, %v671
  %v686 = vmul.f32 %v685, %v684
  %v687 = vmul.f32 0.5, %v686
  %v688 = vsub.f32 1.5, %v687
  %v689 = vmul.f32 %v684, %v688
  %vm690 = vweird.f32 %v671
  %vm691 = vweird.f32 %v684
  %vm692 = vmor %vm690, %vm691
  %v693 = vsel %vm692, %v684, %v689
  %v694 = vrsqrt.pop %v672
  %v695 = vmul.f32 %v694, %v672
  %v696 = vmul.f32 %v695, %v694
  %v697 = vmul.f32 0.5, %v696
  %v698 = vsub.f32 1.5, %v697
  %v699 = vmul.f32 %v694, %v698
  %vm700 = vweird.f32 %v672
  %vm701 = vweird.f32 %v694
  %vm702 = vmor %vm700, %vm701
  %v703 = vsel %vm702, %v694, %v699
  %v704 = vrsqrt.pop %v673
  %v705 = vmul.f32 %v704, %v673
  %v706 = vmul.f32 %v705, %v704
  %v707 = vmul.f32 0.5, %v706
  %v708 = vsub.f32 1.5, %v707
  %v709 = vmul.f32 %v704, %v708
  %vm710 = vweird.f32 %v673
  %vm711 = vweird.f32 %v704
  %vm712 = vmor %vm710, %vm711
  %v713 = vsel %vm712, %v704, %v709
  %v714 = vmul.f32 %v659, %v683
  %v715 = vmul.f32 %v661, %v693
  %v716 = vmul.f32 %v663, %v703
  %v717 = vmul.f32 %v665, %v713
  %v722 = vperm.slane %v714, 0
  %v723 = vperm.slane %v715, 0
  %v724 = vperm.slane %v716, 0
  %v725 = vperm.slane %v717, 0
  %v730 = vmul.f32 %v621, %v722
  %v731 = vmul.f32 %v622, %v723
  %v732 = vmul.f32 %v623, %v724
  %v733 = vmul.f32 %v624, %v725
  %v735 = vrot.slane %v592, 3
  %v736 = vsel %vm337, %v592, %v735
  %v737 = vsel %vm339, %v592, %v735
  %v738 = vrot.slane %v737, 1
  %v739 = vsel %vm342, %v592, %v735
  %v740 = vrot.slane %v739, 2
  %v741 = vsel %vm345, %v592, %v735
  %v742 = vrot.slane %v741, 3
  %v743 = vperm.slane %v736, 0
  %v744 = vperm.slane %v738, 0
  %v745 = vperm.slane %v740, 0
  %v746 = vperm.slane %v742, 0
  %v751 = vadd.f32 %v730, %v743
  %v752 = vadd.f32 %v731, %v744
  %v753 = vadd.f32 %v732, %v745
  %v754 = vadd.f32 %v733, %v746
  %v755 = vmax.f32 %v751, 0.0
  %v756 = vmax.f32 %v752, 0.0
  %v757 = vmax.f32 %v753, 0.0
  %v758 = vmax.f32 %v754, 0.0
  %759 = vmatpush.msra.mxu0 %v91
  %760 = vmatpush.msra.mxu0 %v89
  %761 = vmatpush.msra.mxu0 %v87
  %762 = vmatpush.msra.mxu0 %v85
  %763 = vmatpush.msra.mxu0 %v83
  %764 = vmatpush.msra.mxu0 %v81
  %765 = vmatpush.msra.mxu0 %v79
  %766 = vmatpush.msra.mxu0 %v77
  %767 = vmatpush.msra.mxu0 %v75
  %768 = vmatpush.msra.mxu0 %v73
  %769 = vmatpush.msra.mxu0 %v71
  %770 = vmatpush.msra.mxu0 %v69
  %771 = vmatpush.msra.mxu0 %v67
  %772 = vmatpush.msra.mxu0 %v65
  %773 = vmatpush.msra.mxu0 %v63
  %774 = vmatpush.msra.mxu0 %v61
  %775 = vmatmul.f32.gmra.mxu0 %v755
  %v776 = vpop.f32.mrf.mxu0
  %v777 = vadd.f32 0.0, %v776
  %778 = vmatmul.f32.gmra.mxu0 %v756
  %v779 = vpop.f32.mrf.mxu0
  %v780 = vadd.f32 0.0, %v779
  %781 = vmatmul.f32.gmra.mxu0 %v757
  %v782 = vpop.f32.mrf.mxu0
  %v783 = vadd.f32 0.0, %v782
  %784 = vmatmul.f32.gmra.mxu0 %v758
  %v785 = vpop.f32.mrf.mxu0
  %v786 = vadd.f32 0.0, %v785
  %787 = vdwg.mxu0
  %788 = vmatpush.msra.mxu0 %v92
  %789 = vmatpush.msra.mxu0 %v90
  %790 = vmatpush.msra.mxu0 %v88
  %791 = vmatpush.msra.mxu0 %v86
  %792 = vmatpush.msra.mxu0 %v84
  %793 = vmatpush.msra.mxu0 %v82
  %794 = vmatpush.msra.mxu0 %v80
  %795 = vmatpush.msra.mxu0 %v78
  %796 = vmatpush.msra.mxu0 %v76
  %797 = vmatpush.msra.mxu0 %v74
  %798 = vmatpush.msra.mxu0 %v72
  %799 = vmatpush.msra.mxu0 %v70
  %800 = vmatpush.msra.mxu0 %v68
  %801 = vmatpush.msra.mxu0 %v66
  %802 = vmatpush.msra.mxu0 %v64
  %803 = vmatpush.msra.mxu0 %v62
  %804 = vmatmul.f32.gmra.mxu0 %v755
  %v805 = vpop.f32.mrf.mxu0
  %v806 = vadd.f32 0.0, %v805
  %807 = vmatmul.f32.gmra.mxu0 %v756
  %v808 = vpop.f32.mrf.mxu0
  %v809 = vadd.f32 0.0, %v808
  %810 = vmatmul.f32.gmra.mxu0 %v757
  %v811 = vpop.f32.mrf.mxu0
  %v812 = vadd.f32 0.0, %v811
  %813 = vmatmul.f32.gmra.mxu0 %v758
  %v814 = vpop.f32.mrf.mxu0
  %v815 = vadd.f32 0.0, %v814
  %816 = vdwg.mxu0
  %v817 = vld [vmem:[%s3 + $0xc] sm:$0xff]
  %v818 = vld [vmem:[%s198 + $0xc] sm:$0xff]
  %v819 = vrot.slane %v777, 4
  %v820 = vadd.f32 %v777, %v819
  %v821 = vrot.slane %v820, 2
  %v822 = vadd.f32 %v820, %v821
  %v823 = vrot.slane %v822, 1
  %v824 = vadd.f32 %v822, %v823
  %v825 = vrot.slane %v806, 4
  %v826 = vadd.f32 %v806, %v825
  %v827 = vrot.slane %v826, 2
  %v828 = vadd.f32 %v826, %v827
  %v829 = vrot.slane %v828, 1
  %v830 = vadd.f32 %v828, %v829
  %v831 = vrot.slane %v780, 4
  %v832 = vadd.f32 %v780, %v831
  %v833 = vrot.slane %v832, 2
  %v834 = vadd.f32 %v832, %v833
  %v835 = vrot.slane %v834, 1
  %v836 = vadd.f32 %v834, %v835
  %v837 = vrot.slane %v809, 4
  %v838 = vadd.f32 %v809, %v837
  %v839 = vrot.slane %v838, 2
  %v840 = vadd.f32 %v838, %v839
  %v841 = vrot.slane %v840, 1
  %v842 = vadd.f32 %v840, %v841
  %v843 = vrot.slane %v783, 4
  %v844 = vadd.f32 %v783, %v843
  %v845 = vrot.slane %v844, 2
  %v846 = vadd.f32 %v844, %v845
  %v847 = vrot.slane %v846, 1
  %v848 = vadd.f32 %v846, %v847
  %v849 = vrot.slane %v812, 4
  %v850 = vadd.f32 %v812, %v849
  %v851 = vrot.slane %v850, 2
  %v852 = vadd.f32 %v850, %v851
  %v853 = vrot.slane %v852, 1
  %v854 = vadd.f32 %v852, %v853
  %v855 = vrot.slane %v786, 4
  %v856 = vadd.f32 %v786, %v855
  %v857 = vrot.slane %v856, 2
  %v858 = vadd.f32 %v856, %v857
  %v859 = vrot.slane %v858, 1
  %v860 = vadd.f32 %v858, %v859
  %v861 = vrot.slane %v815, 4
  %v862 = vadd.f32 %v815, %v861
  %v863 = vrot.slane %v862, 2
  %v864 = vadd.f32 %v862, %v863
  %v865 = vrot.slane %v864, 1
  %v866 = vadd.f32 %v864, %v865
  %v867 = vmul.f32 %v824, %v254
  %v868 = vmul.f32 %v830, %v254
  %v869 = vmul.f32 %v836, %v254
  %v870 = vmul.f32 %v842, %v254
  %v871 = vmul.f32 %v848, %v254
  %v872 = vmul.f32 %v854, %v254
  %v873 = vmul.f32 %v860, %v254
  %v874 = vmul.f32 %v866, %v254
  %v875 = vsub.f32 %v777, %v867
  %v876 = vsub.f32 %v806, %v868
  %v877 = vsub.f32 %v780, %v869
  %v878 = vsub.f32 %v809, %v870
  %v879 = vsub.f32 %v783, %v871
  %v880 = vsub.f32 %v812, %v872
  %v881 = vsub.f32 %v786, %v873
  %v882 = vsub.f32 %v815, %v874
  %v883 = vmul.f32 %v875, %v875
  %v884 = vmul.f32 %v876, %v876
  %v885 = vmul.f32 %v877, %v877
  %v886 = vmul.f32 %v878, %v878
  %v887 = vmul.f32 %v879, %v879
  %v888 = vmul.f32 %v880, %v880
  %v889 = vmul.f32 %v881, %v881
  %v890 = vmul.f32 %v882, %v882
  %v891 = vrot.slane %v883, 4
  %v892 = vadd.f32 %v883, %v891
  %v893 = vrot.slane %v892, 2
  %v894 = vadd.f32 %v892, %v893
  %v895 = vrot.slane %v894, 1
  %v896 = vadd.f32 %v894, %v895
  %v897 = vrot.slane %v884, 4
  %v898 = vadd.f32 %v884, %v897
  %v899 = vrot.slane %v898, 2
  %v900 = vadd.f32 %v898, %v899
  %v901 = vrot.slane %v900, 1
  %v902 = vadd.f32 %v900, %v901
  %v903 = vrot.slane %v885, 4
  %v904 = vadd.f32 %v885, %v903
  %v905 = vrot.slane %v904, 2
  %v906 = vadd.f32 %v904, %v905
  %v907 = vrot.slane %v906, 1
  %v908 = vadd.f32 %v906, %v907
  %v909 = vrot.slane %v886, 4
  %v910 = vadd.f32 %v886, %v909
  %v911 = vrot.slane %v910, 2
  %v912 = vadd.f32 %v910, %v911
  %v913 = vrot.slane %v912, 1
  %v914 = vadd.f32 %v912, %v913
  %v915 = vrot.slane %v887, 4
  %v916 = vadd.f32 %v887, %v915
  %v917 = vrot.slane %v916, 2
  %v918 = vadd.f32 %v916, %v917
  %v919 = vrot.slane %v918, 1
  %v920 = vadd.f32 %v918, %v919
  %v921 = vrot.slane %v888, 4
  %v922 = vadd.f32 %v888, %v921
  %v923 = vrot.slane %v922, 2
  %v924 = vadd.f32 %v922, %v923
  %v925 = vrot.slane %v924, 1
  %v926 = vadd.f32 %v924, %v925
  %v927 = vrot.slane %v889, 4
  %v928 = vadd.f32 %v889, %v927
  %v929 = vrot.slane %v928, 2
  %v930 = vadd.f32 %v928, %v929
  %v931 = vrot.slane %v930, 1
  %v932 = vadd.f32 %v930, %v931
  %v933 = vrot.slane %v890, 4
  %v934 = vadd.f32 %v890, %v933
  %v935 = vrot.slane %v934, 2
  %v936 = vadd.f32 %v934, %v935
  %v937 = vrot.slane %v936, 1
  %v938 = vadd.f32 %v936, %v937
  %v939 = vmul.f32 %v896, %v254
  %v940 = vmul.f32 %v902, %v254
  %v941 = vmul.f32 %v908, %v254
  %v942 = vmul.f32 %v914, %v254
  %v943 = vmul.f32 %v920, %v254
  %v944 = vmul.f32 %v926, %v254
  %v945 = vmul.f32 %v932, %v254
  %v946 = vmul.f32 %v938, %v254
  %v948 = vrot.slane %v817, 3
  %v949 = vsel %vm337, %v817, %v948
  %v950 = vsel %vm339, %v817, %v948
  %v951 = vrot.slane %v950, 1
  %v952 = vsel %vm342, %v817, %v948
  %v953 = vrot.slane %v952, 2
  %v954 = vsel %vm345, %v817, %v948
  %v955 = vrot.slane %v954, 3
  %v960 = vadd.f32 %v939, 1e-05
  %v961 = vadd.f32 %v940, 1e-05
  %v962 = vadd.f32 %v941, 1e-05
  %v963 = vadd.f32 %v942, 1e-05
  %v964 = vadd.f32 %v943, 1e-05
  %v965 = vadd.f32 %v944, 1e-05
  %v966 = vadd.f32 %v945, 1e-05
  %v967 = vadd.f32 %v946, 1e-05
  %v968 = vrsqrt.pop %v960
  %v969 = vmul.f32 %v968, %v960
  %v970 = vmul.f32 %v969, %v968
  %v971 = vmul.f32 0.5, %v970
  %v972 = vsub.f32 1.5, %v971
  %v973 = vmul.f32 %v968, %v972
  %vm974 = vweird.f32 %v960
  %vm975 = vweird.f32 %v968
  %vm976 = vmor %vm974, %vm975
  %v977 = vsel %vm976, %v968, %v973
  %v978 = vrsqrt.pop %v961
  %v979 = vmul.f32 %v978, %v961
  %v980 = vmul.f32 %v979, %v978
  %v981 = vmul.f32 0.5, %v980
  %v982 = vsub.f32 1.5, %v981
  %v983 = vmul.f32 %v978, %v982
  %vm984 = vweird.f32 %v961
  %vm985 = vweird.f32 %v978
  %vm986 = vmor %vm984, %vm985
  %v987 = vsel %vm986, %v978, %v983
  %v988 = vrsqrt.pop %v962
  %v989 = vmul.f32 %v988, %v962
  %v990 = vmul.f32 %v989, %v988
  %v991 = vmul.f32 0.5, %v990
  %v992 = vsub.f32 1.5, %v991
  %v993 = vmul.f32 %v988, %v992
  %vm994 = vweird.f32 %v962
  %vm995 = vweird.f32 %v988
  %vm996 = vmor %vm994, %vm995
  %v997 = vsel %vm996, %v988, %v993
  %v998 = vrsqrt.pop %v963
  %v999 = vmul.f32 %v998, %v963
  %v1000 = vmul.f32 %v999, %v998
  %v1001 = vmul.f32 0.5, %v1000
  %v1002 = vsub.f32 1.5, %v1001
  %v1003 = vmul.f32 %v998, %v1002
  %vm1004 = vweird.f32 %v963
  %vm1005 = vweird.f32 %v998
  %vm1006 = vmor %vm1004, %vm1005
  %v1007 = vsel %vm1006, %v998, %v1003
  %v1008 = vrsqrt.pop %v964
  %v1009 = vmul.f32 %v1008, %v964
  %v1010 = vmul.f32 %v1009, %v1008
  %v1011 = vmul.f32 0.5, %v1010
  %v1012 = vsub.f32 1.5, %v1011
  %v1013 = vmul.f32 %v1008, %v1012
  %vm1014 = vweird.f32 %v964
  %vm1015 = vweird.f32 %v1008
  %vm1016 = vmor %vm1014, %vm1015
  %v1017 = vsel %vm1016, %v1008, %v1013
  %v1018 = vrsqrt.pop %v965
  %v1019 = vmul.f32 %v1018, %v965
  %v1020 = vmul.f32 %v1019, %v1018
  %v1021 = vmul.f32 0.5, %v1020
  %v1022 = vsub.f32 1.5, %v1021
  %v1023 = vmul.f32 %v1018, %v1022
  %vm1024 = vweird.f32 %v965
  %vm1025 = vweird.f32 %v1018
  %vm1026 = vmor %vm1024, %vm1025
  %v1027 = vsel %vm1026, %v1018, %v1023
  %v1028 = vrsqrt.pop %v966
  %v1029 = vmul.f32 %v1028, %v966
  %v1030 = vmul.f32 %v1029, %v1028
  %v1031 = vmul.f32 0.5, %v1030
  %v1032 = vsub.f32 1.5, %v1031
  %v1033 = vmul.f32 %v1028, %v1032
  %vm1034 = vweird.f32 %v966
  %vm1035 = vweird.f32 %v1028
  %vm1036 = vmor %vm1034, %vm1035
  %v1037 = vsel %vm1036, %v1028, %v1033
  %v1038 = vrsqrt.pop %v967
  %v1039 = vmul.f32 %v1038, %v967
  %v1040 = vmul.f32 %v1039, %v1038
  %v1041 = vmul.f32 0.5, %v1040
  %v1042 = vsub.f32 1.5, %v1041
  %v1043 = vmul.f32 %v1038, %v1042
  %vm1044 = vweird.f32 %v967
  %vm1045 = vweird.f32 %v1038
  %vm1046 = vmor %vm1044, %vm1045
  %v1047 = vsel %vm1046, %v1038, %v1043
  %v1056 = vrot.slane %v987, 7
  %v1057 = vrot.slane %v1007, 7
  %v1058 = vrot.slane %v1027, 7
  %v1059 = vrot.slane %v1047, 7
  %v1060 = vsel %vm337, %v977, %v1056
  %v1061 = vsel %vm337, %v997, %v1057
  %v1062 = vsel %vm337, %v1017, %v1058
  %v1063 = vsel %vm337, %v1037, %v1059
  %v1068 = vmul.f32 %v949, %v1060
  %v1069 = vmul.f32 %v951, %v1061
  %v1070 = vmul.f32 %v953, %v1062
  %v1071 = vmul.f32 %v955, %v1063
  %v1076 = vperm.slane %v1068, 0
  %v1077 = vperm.slane %v1068, 1
  %v1078 = vperm.slane %v1069, 0
  %v1079 = vperm.slane %v1069, 1
  %v1080 = vperm.slane %v1070, 0
  %v1081 = vperm.slane %v1070, 1
  %v1082 = vperm.slane %v1071, 0
  %v1083 = vperm.slane %v1071, 1
  %v1092 = vmul.f32 %v875, %v1076
  %v1093 = vmul.f32 %v876, %v1077
  %v1094 = vmul.f32 %v877, %v1078
  %v1095 = vmul.f32 %v878, %v1079
  %v1096 = vmul.f32 %v879, %v1080
  %v1097 = vmul.f32 %v880, %v1081
  %v1098 = vmul.f32 %v881, %v1082
  %v1099 = vmul.f32 %v882, %v1083
  %v1101 = vrot.slane %v818, 3
  %v1102 = vsel %vm337, %v818, %v1101
  %v1103 = vsel %vm339, %v818, %v1101
  %v1104 = vrot.slane %v1103, 1
  %v1105 = vsel %vm342, %v818, %v1101
  %v1106 = vrot.slane %v1105, 2
  %v1107 = vsel %vm345, %v818, %v1101
  %v1108 = vrot.slane %v1107, 3
  %v1109 = vperm.slane %v1102, 0
  %v1110 = vperm.slane %v1102, 1
  %v1111 = vperm.slane %v1104, 0
  %v1112 = vperm.slane %v1104, 1
  %v1113 = vperm.slane %v1106, 0
  %v1114 = vperm.slane %v1106, 1
  %v1115 = vperm.slane %v1108, 0
  %v1116 = vperm.slane %v1108, 1
  %v1125 = vadd.f32 %v1092, %v1109
  %v1126 = vadd.f32 %v1093, %v1110
  %v1127 = vadd.f32 %v1094, %v1111
  %v1128 = vadd.f32 %v1095, %v1112
  %v1129 = vadd.f32 %v1096, %v1113
  %v1130 = vadd.f32 %v1097, %v1114
  %v1131 = vadd.f32 %v1098, %v1115
  %v1132 = vadd.f32 %v1099, %v1116
  %v1133 = vmax.f32 %v1125, 0.0
  %v1134 = vmax.f32 %v1126, 0.0
  %v1135 = vmax.f32 %v1127, 0.0
  %v1136 = vmax.f32 %v1128, 0.0
  %v1137 = vmax.f32 %v1129, 0.0
  %v1138 = vmax.f32 %v1130, 0.0
  %v1139 = vmax.f32 %v1131, 0.0
  %v1140 = vmax.f32 %v1132, 0.0
  %1141 = vmatpush.msra.mxu0 %v108
  %1142 = vmatpush.msra.mxu0 %v107
  %1143 = vmatpush.msra.mxu0 %v106
  %1144 = vmatpush.msra.mxu0 %v105
  %1145 = vmatpush.msra.mxu0 %v104
  %1146 = vmatpush.msra.mxu0 %v103
  %1147 = vmatpush.msra.mxu0 %v102
  %1148 = vmatpush.msra.mxu0 %v101
  %1149 = vmatpush.msra.mxu0 %v100
  %1150 = vmatpush.msra.mxu0 %v99
  %1151 = vmatpush.msra.mxu0 %v98
  %1152 = vmatpush.msra.mxu0 %v97
  %1153 = vmatpush.msra.mxu0 %v96
  %1154 = vmatpush.msra.mxu0 %v95
  %1155 = vmatpush.msra.mxu0 %v94
  %1156 = vmatpush.msra.mxu0 %v93
  %1157 = vmatmul.f32.gmra.mxu0 %v1133
  %v1158 = vpop.f32.mrf.mxu0
  %v1159 = vadd.f32 %v125, %v1158
  %1160 = vmatmul.f32.gmra.mxu0 %v1135
  %v1161 = vpop.f32.mrf.mxu0
  %v1162 = vadd.f32 %v125, %v1161
  %1163 = vmatmul.f32.gmra.mxu0 %v1137
  %v1164 = vpop.f32.mrf.mxu0
  %v1165 = vadd.f32 %v125, %v1164
  %1166 = vmatmul.f32.gmra.mxu0 %v1139
  %v1167 = vpop.f32.mrf.mxu0
  %v1168 = vadd.f32 %v125, %v1167
  %1169 = vdwg.mxu0
  %1170 = vmatpush.msra.mxu0 %v124
  %1171 = vmatpush.msra.mxu0 %v123
  %1172 = vmatpush.msra.mxu0 %v122
  %1173 = vmatpush.msra.mxu0 %v121
  %1174 = vmatpush.msra.mxu0 %v120
  %1175 = vmatpush.msra.mxu0 %v119
  %1176 = vmatpush.msra.mxu0 %v118
  %1177 = vmatpush.msra.mxu0 %v117
  %1178 = vmatpush.msra.mxu0 %v116
  %1179 = vmatpush.msra.mxu0 %v115
  %1180 = vmatpush.msra.mxu0 %v114
  %1181 = vmatpush.msra.mxu0 %v113
  %1182 = vmatpush.msra.mxu0 %v112
  %1183 = vmatpush.msra.mxu0 %v111
  %1184 = vmatpush.msra.mxu0 %v110
  %1185 = vmatpush.msra.mxu0 %v109
  %1186 = vmatmul.f32.gmra.mxu0 %v1134
  %v1187 = vpop.f32.mrf.mxu0
  %v1188 = vadd.f32 %v1159, %v1187
  %1189 = vmatmul.f32.gmra.mxu0 %v1136
  %v1190 = vpop.f32.mrf.mxu0
  %v1191 = vadd.f32 %v1162, %v1190
  %1192 = vmatmul.f32.gmra.mxu0 %v1138
  %v1193 = vpop.f32.mrf.mxu0
  %v1194 = vadd.f32 %v1165, %v1193
  %1195 = vmatmul.f32.gmra.mxu0 %v1140
  %v1196 = vpop.f32.mrf.mxu0
  %v1197 = vadd.f32 %v1168, %v1196
  %1198 = vdwg.mxu0
  %1199 = vst.msk [vmem:[%s4] sm:$0xff] %vm126, %v1188
  %1200 = vst.msk [vmem:[%s4 + $0x8] sm:$0xff] %vm126, %v1191
  %1201 = vst.msk [vmem:[%s4 + $0x10] sm:$0xff] %vm126, %v1194
  %1202 = vst.msk [vmem:[%s4 + $0x18] sm:$0xff] %vm126, %v1197
  %s1203 = scalar_lea.vmem %s2, 336
  %v1204 = vld [vmem:[%s1203 + $0x100] sm:$0xff]
  %v1205 = vld [vmem:[%s1203 + $0x108] sm:$0xff]
  %v1206 = vld [vmem:[%s1203 + $0x110] sm:$0xff]
  %v1207 = vld [vmem:[%s1203 + $0x118] sm:$0xff]
  %v1208 = vld [vmem:[%s1203 + $0x120] sm:$0xff]
  %v1209 = vld [vmem:[%s1203 + $0x128] sm:$0xff]
  %v1210 = vld [vmem:[%s1203 + $0x130] sm:$0xff]
  %v1211 = vld [vmem:[%s1203 + $0x138] sm:$0xff]
  %s1212 = scalar_lea.vmem %s1, 512
  %v1213 = vld [vmem:[%s1212] sm:$0xff]
  %v1214 = vld [vmem:[%s1212 + $0x10] sm:$0xff]
  %v1215 = vld [vmem:[%s1212 + $0x20] sm:$0xff]
  %v1216 = vld [vmem:[%s1212 + $0x30] sm:$0xff]
  %v1217 = vld [vmem:[%s1212 + $0x40] sm:$0xff]
  %v1218 = vld [vmem:[%s1212 + $0x50] sm:$0xff]
  %v1219 = vld [vmem:[%s1212 + $0x60] sm:$0xff]
  %v1220 = vld [vmem:[%s1212 + $0x70] sm:$0xff]
  %v1221 = vld [vmem:[%s1212 + $0x80] sm:$0xff]
  %v1222 = vld [vmem:[%s1212 + $0x90] sm:$0xff]
  %v1223 = vld [vmem:[%s1212 + $0xa0] sm:$0xff]
  %v1224 = vld [vmem:[%s1212 + $0xb0] sm:$0xff]
  %v1225 = vld [vmem:[%s1212 + $0xc0] sm:$0xff]
  %v1226 = vld [vmem:[%s1212 + $0xd0] sm:$0xff]
  %v1227 = vld [vmem:[%s1212 + $0xe0] sm:$0xff]
  %v1228 = vld [vmem:[%s1212 + $0xf0] sm:$0xff]
  %v1229 = vld [vmem:[%s1212 + $0x100] sm:$0xff]
  %v1230 = vld [vmem:[%s1212 + $0x110] sm:$0xff]
  %v1231 = vld [vmem:[%s1212 + $0x120] sm:$0xff]
  %v1232 = vld [vmem:[%s1212 + $0x130] sm:$0xff]
  %v1233 = vld [vmem:[%s1212 + $0x140] sm:$0xff]
  %v1234 = vld [vmem:[%s1212 + $0x150] sm:$0xff]
  %v1235 = vld [vmem:[%s1212 + $0x160] sm:$0xff]
  %v1236 = vld [vmem:[%s1212 + $0x170] sm:$0xff]
  %v1237 = vld [vmem:[%s1212 + $0x180] sm:$0xff]
  %v1238 = vld [vmem:[%s1212 + $0x190] sm:$0xff]
  %v1239 = vld [vmem:[%s1212 + $0x1a0] sm:$0xff]
  %v1240 = vld [vmem:[%s1212 + $0x1b0] sm:$0xff]
  %v1241 = vld [vmem:[%s1212 + $0x1c0] sm:$0xff]
  %v1242 = vld [vmem:[%s1212 + $0x1d0] sm:$0xff]
  %v1243 = vld [vmem:[%s1212 + $0x1e0] sm:$0xff]
  %v1244 = vld [vmem:[%s1212 + $0x1f0] sm:$0xff]
  %v1245 = vld [vmem:[%s1203] sm:$0xff]
  %v1246 = vld [vmem:[%s1203 + $0x8] sm:$0xff]
  %v1247 = vld [vmem:[%s1203 + $0x10] sm:$0xff]
  %v1248 = vld [vmem:[%s1203 + $0x18] sm:$0xff]
  %v1249 = vld [vmem:[%s1203 + $0x20] sm:$0xff]
  %v1250 = vld [vmem:[%s1203 + $0x28] sm:$0xff]
  %v1251 = vld [vmem:[%s1203 + $0x30] sm:$0xff]
  %v1252 = vld [vmem:[%s1203 + $0x38] sm:$0xff]
  %v1253 = vld [vmem:[%s1203 + $0x40] sm:$0xff]
  %v1254 = vld [vmem:[%s1203 + $0x48] sm:$0xff]
  %v1255 = vld [vmem:[%s1203 + $0x50] sm:$0xff]
  %v1256 = vld [vmem:[%s1203 + $0x58] sm:$0xff]
  %v1257 = vld [vmem:[%s1203 + $0x60] sm:$0xff]
  %v1258 = vld [vmem:[%s1203 + $0x68] sm:$0xff]
  %v1259 = vld [vmem:[%s1203 + $0x70] sm:$0xff]
  %v1260 = vld [vmem:[%s1203 + $0x78] sm:$0xff]
  %v1261 = vld [vmem:[%s1203 + $0x80] sm:$0xff]
  %v1262 = vld [vmem:[%s1203 + $0x88] sm:$0xff]
  %v1263 = vld [vmem:[%s1203 + $0x90] sm:$0xff]
  %v1264 = vld [vmem:[%s1203 + $0x98] sm:$0xff]
  %v1265 = vld [vmem:[%s1203 + $0xa0] sm:$0xff]
  %v1266 = vld [vmem:[%s1203 + $0xa8] sm:$0xff]
  %v1267 = vld [vmem:[%s1203 + $0xb0] sm:$0xff]
  %v1268 = vld [vmem:[%s1203 + $0xb8] sm:$0xff]
  %v1269 = vld [vmem:[%s1203 + $0xc0] sm:$0xff]
  %v1270 = vld [vmem:[%s1203 + $0xc8] sm:$0xff]
  %v1271 = vld [vmem:[%s1203 + $0xd0] sm:$0xff]
  %v1272 = vld [vmem:[%s1203 + $0xd8] sm:$0xff]
  %v1273 = vld [vmem:[%s1203 + $0xe0] sm:$0xff]
  %v1274 = vld [vmem:[%s1203 + $0xe8] sm:$0xff]
  %v1275 = vld [vmem:[%s1203 + $0xf0] sm:$0xff]
  %v1276 = vld [vmem:[%s1203 + $0xf8] sm:$0xff]
  %v1277 = vld [vmem:[%s1212 + $0x8] sm:$0xff]
  %v1278 = vld [vmem:[%s1212 + $0x18] sm:$0xff]
  %v1279 = vld [vmem:[%s1212 + $0x28] sm:$0xff]
  %v1280 = vld [vmem:[%s1212 + $0x38] sm:$0xff]
  %v1281 = vld [vmem:[%s1212 + $0x48] sm:$0xff]
  %v1282 = vld [vmem:[%s1212 + $0x58] sm:$0xff]
  %v1283 = vld [vmem:[%s1212 + $0x68] sm:$0xff]
  %v1284 = vld [vmem:[%s1212 + $0x78] sm:$0xff]
  %v1285 = vld [vmem:[%s1212 + $0x88] sm:$0xff]
  %v1286 = vld [vmem:[%s1212 + $0x98] sm:$0xff]
  %v1287 = vld [vmem:[%s1212 + $0xa8] sm:$0xff]
  %v1288 = vld [vmem:[%s1212 + $0xb8] sm:$0xff]
  %v1289 = vld [vmem:[%s1212 + $0xc8] sm:$0xff]
  %v1290 = vld [vmem:[%s1212 + $0xd8] sm:$0xff]
  %v1291 = vld [vmem:[%s1212 + $0xe8] sm:$0xff]
  %v1292 = vld [vmem:[%s1212 + $0xf8] sm:$0xff]
  %v1293 = vld [vmem:[%s1212 + $0x108] sm:$0xff]
  %v1294 = vld [vmem:[%s1212 + $0x118] sm:$0xff]
  %v1295 = vld [vmem:[%s1212 + $0x128] sm:$0xff]
  %v1296 = vld [vmem:[%s1212 + $0x138] sm:$0xff]
  %v1297 = vld [vmem:[%s1212 + $0x148] sm:$0xff]
  %v1298 = vld [vmem:[%s1212 + $0x158] sm:$0xff]
  %v1299 = vld [vmem:[%s1212 + $0x168] sm:$0xff]
  %v1300 = vld [vmem:[%s1212 + $0x178] sm:$0xff]
  %v1301 = vld [vmem:[%s1212 + $0x188] sm:$0xff]
  %v1302 = vld [vmem:[%s1212 + $0x198] sm:$0xff]
  %v1303 = vld [vmem:[%s1212 + $0x1a8] sm:$0xff]
  %v1304 = vld [vmem:[%s1212 + $0x1b8] sm:$0xff]
  %v1305 = vld [vmem:[%s1212 + $0x1c8] sm:$0xff]
  %v1306 = vld [vmem:[%s1212 + $0x1d8] sm:$0xff]
  %v1307 = vld [vmem:[%s1212 + $0x1e8] sm:$0xff]
  %v1308 = vld [vmem:[%s1212 + $0x1f8] sm:$0xff]
  %v1309 = vld [vmem:[%s1203 + $0x140] ss:$0 sm:$0xff]
  %1310 = vmatpush.msra.mxu0 0.0
  %1311 = vmatpush.msra.mxu0 0.0
  %1312 = vmatpush.msra.mxu0 0.0
  %1313 = vmatpush.msra.mxu0 0.0
  %1314 = vmatpush.msra.mxu0 0.0
  %1315 = vmatpush.msra.mxu0 0.0
  %1316 = vmatpush.msra.mxu0 0.0
  %1317 = vmatpush.msra.mxu0 0.0
  %1318 = vmatpush.msra.mxu0 0.0
  %1319 = vmatpush.msra.mxu0 0.0
  %1320 = vmatpush.msra.mxu0 0.0
  %1321 = vmatpush.msra.mxu0 0.0
  %1322 = vmatpush.msra.mxu0 %v1210
  %1323 = vmatpush.msra.mxu0 %v1208
  %1324 = vmatpush.msra.mxu0 %v1206
  %1325 = vmatpush.msra.mxu0 %v1204
  %1326 = vmatmul.f32.gmra.mxu0 %v128
  %v1327 = vpop.f32.mrf.mxu0
  %v1328 = vadd.f32 0.0, %v1327
  %1329 = vmatmul.f32.gmra.mxu0 %v131
  %v1330 = vpop.f32.mrf.mxu0
  %v1331 = vadd.f32 0.0, %v1330
  %1332 = vmatmul.f32.gmra.mxu0 %v134
  %v1333 = vpop.f32.mrf.mxu0
  %v1334 = vadd.f32 0.0, %v1333
  %1335 = vmatmul.f32.gmra.mxu0 %v137
  %v1336 = vpop.f32.mrf.mxu0
  %v1337 = vadd.f32 0.0, %v1336
  %1338 = vdwg.mxu0
  %1339 = vmatpush.msra.mxu0 0.0
  %1340 = vmatpush.msra.mxu0 0.0
  %1341 = vmatpush.msra.mxu0 0.0
  %1342 = vmatpush.msra.mxu0 0.0
  %1343 = vmatpush.msra.mxu0 0.0
  %1344 = vmatpush.msra.mxu0 0.0
  %1345 = vmatpush.msra.mxu0 0.0
  %1346 = vmatpush.msra.mxu0 0.0
  %1347 = vmatpush.msra.mxu0 0.0
  %1348 = vmatpush.msra.mxu0 0.0
  %1349 = vmatpush.msra.mxu0 0.0
  %1350 = vmatpush.msra.mxu0 0.0
  %1351 = vmatpush.msra.mxu0 %v1211
  %1352 = vmatpush.msra.mxu0 %v1209
  %1353 = vmatpush.msra.mxu0 %v1207
  %1354 = vmatpush.msra.mxu0 %v1205
  %1355 = vmatmul.f32.gmra.mxu0 %v128
  %v1356 = vpop.f32.mrf.mxu0
  %v1357 = vadd.f32 0.0, %v1356
  %1358 = vmatmul.f32.gmra.mxu0 %v131
  %v1359 = vpop.f32.mrf.mxu0
  %v1360 = vadd.f32 0.0, %v1359
  %1361 = vmatmul.f32.gmra.mxu0 %v134
  %v1362 = vpop.f32.mrf.mxu0
  %v1363 = vadd.f32 0.0, %v1362
  %1364 = vmatmul.f32.gmra.mxu0 %v137
  %v1365 = vpop.f32.mrf.mxu0
  %v1366 = vadd.f32 0.0, %v1365
  %1367 = vdwg.mxu0
  %s1368 = scalar_lea.vmem %s3, 40
  %v1369 = vld [vmem:[%s1368] sm:$0xff]
  %s1370 = scalar_lea.vmem %s3, 60
  %v1371 = vld [vmem:[%s1370] sm:$0xff]
  %v1372 = vrot.slane %v1328, 4
  %v1373 = vadd.f32 %v1328, %v1372
  %v1374 = vrot.slane %v1373, 2
  %v1375 = vadd.f32 %v1373, %v1374
  %v1376 = vrot.slane %v1375, 1
  %v1377 = vadd.f32 %v1375, %v1376
  %v1378 = vrot.slane %v1357, 4
  %v1379 = vadd.f32 %v1357, %v1378
  %v1380 = vrot.slane %v1379, 2
  %v1381 = vadd.f32 %v1379, %v1380
  %v1382 = vrot.slane %v1381, 1
  %v1383 = vadd.f32 %v1381, %v1382
  %v1384 = vrot.slane %v1331, 4
  %v1385 = vadd.f32 %v1331, %v1384
  %v1386 = vrot.slane %v1385, 2
  %v1387 = vadd.f32 %v1385, %v1386
  %v1388 = vrot.slane %v1387, 1
  %v1389 = vadd.f32 %v1387, %v1388
  %v1390 = vrot.slane %v1360, 4
  %v1391 = vadd.f32 %v1360, %v1390
  %v1392 = vrot.slane %v1391, 2
  %v1393 = vadd.f32 %v1391, %v1392
  %v1394 = vrot.slane %v1393, 1
  %v1395 = vadd.f32 %v1393, %v1394
  %v1396 = vrot.slane %v1334, 4
  %v1397 = vadd.f32 %v1334, %v1396
  %v1398 = vrot.slane %v1397, 2
  %v1399 = vadd.f32 %v1397, %v1398
  %v1400 = vrot.slane %v1399, 1
  %v1401 = vadd.f32 %v1399, %v1400
  %v1402 = vrot.slane %v1363, 4
  %v1403 = vadd.f32 %v1363, %v1402
  %v1404 = vrot.slane %v1403, 2
  %v1405 = vadd.f32 %v1403, %v1404
  %v1406 = vrot.slane %v1405, 1
  %v1407 = vadd.f32 %v1405, %v1406
  %v1408 = vrot.slane %v1337, 4
  %v1409 = vadd.f32 %v1337, %v1408
  %v1410 = vrot.slane %v1409, 2
  %v1411 = vadd.f32 %v1409, %v1410
  %v1412 = vrot.slane %v1411, 1
  %v1413 = vadd.f32 %v1411, %v1412
  %v1414 = vrot.slane %v1366, 4
  %v1415 = vadd.f32 %v1366, %v1414
  %v1416 = vrot.slane %v1415, 2
  %v1417 = vadd.f32 %v1415, %v1416
  %v1418 = vrot.slane %v1417, 1
  %v1419 = vadd.f32 %v1417, %v1418
  %v1420 = vmul.f32 %v1377, %v254
  %v1421 = vmul.f32 %v1383, %v254
  %v1422 = vmul.f32 %v1389, %v254
  %v1423 = vmul.f32 %v1395, %v254
  %v1424 = vmul.f32 %v1401, %v254
  %v1425 = vmul.f32 %v1407, %v254
  %v1426 = vmul.f32 %v1413, %v254
  %v1427 = vmul.f32 %v1419, %v254
  %v1428 = vsub.f32 %v1328, %v1420
  %v1429 = vsub.f32 %v1357, %v1421
  %v1430 = vsub.f32 %v1331, %v1422
  %v1431 = vsub.f32 %v1360, %v1423
  %v1432 = vsub.f32 %v1334, %v1424
  %v1433 = vsub.f32 %v1363, %v1425
  %v1434 = vsub.f32 %v1337, %v1426
  %v1435 = vsub.f32 %v1366, %v1427
  %v1436 = vmul.f32 %v1428, %v1428
  %v1437 = vmul.f32 %v1429, %v1429
  %v1438 = vmul.f32 %v1430, %v1430
  %v1439 = vmul.f32 %v1431, %v1431
  %v1440 = vmul.f32 %v1432, %v1432
  %v1441 = vmul.f32 %v1433, %v1433
  %v1442 = vmul.f32 %v1434, %v1434
  %v1443 = vmul.f32 %v1435, %v1435
  %v1444 = vrot.slane %v1436, 4
  %v1445 = vadd.f32 %v1436, %v1444
  %v1446 = vrot.slane %v1445, 2
  %v1447 = vadd.f32 %v1445, %v1446
  %v1448 = vrot.slane %v1447, 1
  %v1449 = vadd.f32 %v1447, %v1448
  %v1450 = vrot.slane %v1437, 4
  %v1451 = vadd.f32 %v1437, %v1450
  %v1452 = vrot.slane %v1451, 2
  %v1453 = vadd.f32 %v1451, %v1452
  %v1454 = vrot.slane %v1453, 1
  %v1455 = vadd.f32 %v1453, %v1454
  %v1456 = vrot.slane %v1438, 4
  %v1457 = vadd.f32 %v1438, %v1456
  %v1458 = vrot.slane %v1457, 2
  %v1459 = vadd.f32 %v1457, %v1458
  %v1460 = vrot.slane %v1459, 1
  %v1461 = vadd.f32 %v1459, %v1460
  %v1462 = vrot.slane %v1439, 4
  %v1463 = vadd.f32 %v1439, %v1462
  %v1464 = vrot.slane %v1463, 2
  %v1465 = vadd.f32 %v1463, %v1464
  %v1466 = vrot.slane %v1465, 1
  %v1467 = vadd.f32 %v1465, %v1466
  %v1468 = vrot.slane %v1440, 4
  %v1469 = vadd.f32 %v1440, %v1468
  %v1470 = vrot.slane %v1469, 2
  %v1471 = vadd.f32 %v1469, %v1470
  %v1472 = vrot.slane %v1471, 1
  %v1473 = vadd.f32 %v1471, %v1472
  %v1474 = vrot.slane %v1441, 4
  %v1475 = vadd.f32 %v1441, %v1474
  %v1476 = vrot.slane %v1475, 2
  %v1477 = vadd.f32 %v1475, %v1476
  %v1478 = vrot.slane %v1477, 1
  %v1479 = vadd.f32 %v1477, %v1478
  %v1480 = vrot.slane %v1442, 4
  %v1481 = vadd.f32 %v1442, %v1480
  %v1482 = vrot.slane %v1481, 2
  %v1483 = vadd.f32 %v1481, %v1482
  %v1484 = vrot.slane %v1483, 1
  %v1485 = vadd.f32 %v1483, %v1484
  %v1486 = vrot.slane %v1443, 4
  %v1487 = vadd.f32 %v1443, %v1486
  %v1488 = vrot.slane %v1487, 2
  %v1489 = vadd.f32 %v1487, %v1488
  %v1490 = vrot.slane %v1489, 1
  %v1491 = vadd.f32 %v1489, %v1490
  %v1492 = vmul.f32 %v1449, %v254
  %v1493 = vmul.f32 %v1455, %v254
  %v1494 = vmul.f32 %v1461, %v254
  %v1495 = vmul.f32 %v1467, %v254
  %v1496 = vmul.f32 %v1473, %v254
  %v1497 = vmul.f32 %v1479, %v254
  %v1498 = vmul.f32 %v1485, %v254
  %v1499 = vmul.f32 %v1491, %v254
  %v1501 = vrot.slane %v1369, 3
  %v1502 = vsel %vm337, %v1369, %v1501
  %v1503 = vsel %vm339, %v1369, %v1501
  %v1504 = vrot.slane %v1503, 1
  %v1505 = vsel %vm342, %v1369, %v1501
  %v1506 = vrot.slane %v1505, 2
  %v1507 = vsel %vm345, %v1369, %v1501
  %v1508 = vrot.slane %v1507, 3
  %v1513 = vadd.f32 %v1492, 1e-05
  %v1514 = vadd.f32 %v1493, 1e-05
  %v1515 = vadd.f32 %v1494, 1e-05
  %v1516 = vadd.f32 %v1495, 1e-05
  %v1517 = vadd.f32 %v1496, 1e-05
  %v1518 = vadd.f32 %v1497, 1e-05
  %v1519 = vadd.f32 %v1498, 1e-05
  %v1520 = vadd.f32 %v1499, 1e-05
  %v1521 = vrsqrt.pop %v1513
  %v1522 = vmul.f32 %v1521, %v1513
  %v1523 = vmul.f32 %v1522, %v1521
  %v1524 = vmul.f32 0.5, %v1523
  %v1525 = vsub.f32 1.5, %v1524
  %v1526 = vmul.f32 %v1521, %v1525
  %vm1527 = vweird.f32 %v1513
  %vm1528 = vweird.f32 %v1521
  %vm1529 = vmor %vm1527, %vm1528
  %v1530 = vsel %vm1529, %v1521, %v1526
  %v1531 = vrsqrt.pop %v1514
  %v1532 = vmul.f32 %v1531, %v1514
  %v1533 = vmul.f32 %v1532, %v1531
  %v1534 = vmul.f32 0.5, %v1533
  %v1535 = vsub.f32 1.5, %v1534
  %v1536 = vmul.f32 %v1531, %v1535
  %vm1537 = vweird.f32 %v1514
  %vm1538 = vweird.f32 %v1531
  %vm1539 = vmor %vm1537, %vm1538
  %v1540 = vsel %vm1539, %v1531, %v1536
  %v1541 = vrsqrt.pop %v1515
  %v1542 = vmul.f32 %v1541, %v1515
  %v1543 = vmul.f32 %v1542, %v1541
  %v1544 = vmul.f32 0.5, %v1543
  %v1545 = vsub.f32 1.5, %v1544
  %v1546 = vmul.f32 %v1541, %v1545
  %vm1547 = vweird.f32 %v1515
  %vm1548 = vweird.f32 %v1541
  %vm1549 = vmor %vm1547, %vm1548
  %v1550 = vsel %vm1549, %v1541, %v1546
  %v1551 = vrsqrt.pop %v1516
  %v1552 = vmul.f32 %v1551, %v1516
  %v1553 = vmul.f32 %v1552, %v1551
  %v1554 = vmul.f32 0.5, %v1553
  %v1555 = vsub.f32 1.5, %v1554
  %v1556 = vmul.f32 %v1551, %v1555
  %vm1557 = vweird.f32 %v1516
  %vm1558 = vweird.f32 %v1551
  %vm1559 = vmor %vm1557, %vm1558
  %v1560 = vsel %vm1559, %v1551, %v1556
  %v1561 = vrsqrt.pop %v1517
  %v1562 = vmul.f32 %v1561, %v1517
  %v1563 = vmul.f32 %v1562, %v1561
  %v1564 = vmul.f32 0.5, %v1563
  %v1565 = vsub.f32 1.5, %v1564
  %v1566 = vmul.f32 %v1561, %v1565
  %vm1567 = vweird.f32 %v1517
  %vm1568 = vweird.f32 %v1561
  %vm1569 = vmor %vm1567, %vm1568
  %v1570 = vsel %vm1569, %v1561, %v1566
  %v1571 = vrsqrt.pop %v1518
  %v1572 = vmul.f32 %v1571, %v1518
  %v1573 = vmul.f32 %v1572, %v1571
  %v1574 = vmul.f32 0.5, %v1573
  %v1575 = vsub.f32 1.5, %v1574
  %v1576 = vmul.f32 %v1571, %v1575
  %vm1577 = vweird.f32 %v1518
  %vm1578 = vweird.f32 %v1571
  %vm1579 = vmor %vm1577, %vm1578
  %v1580 = vsel %vm1579, %v1571, %v1576
  %v1581 = vrsqrt.pop %v1519
  %v1582 = vmul.f32 %v1581, %v1519
  %v1583 = vmul.f32 %v1582, %v1581
  %v1584 = vmul.f32 0.5, %v1583
  %v1585 = vsub.f32 1.5, %v1584
  %v1586 = vmul.f32 %v1581, %v1585
  %vm1587 = vweird.f32 %v1519
  %vm1588 = vweird.f32 %v1581
  %vm1589 = vmor %vm1587, %vm1588
  %v1590 = vsel %vm1589, %v1581, %v1586
  %v1591 = vrsqrt.pop %v1520
  %v1592 = vmul.f32 %v1591, %v1520
  %v1593 = vmul.f32 %v1592, %v1591
  %v1594 = vmul.f32 0.5, %v1593
  %v1595 = vsub.f32 1.5, %v1594
  %v1596 = vmul.f32 %v1591, %v1595
  %vm1597 = vweird.f32 %v1520
  %vm1598 = vweird.f32 %v1591
  %vm1599 = vmor %vm1597, %vm1598
  %v1600 = vsel %vm1599, %v1591, %v1596
  %v1609 = vrot.slane %v1540, 7
  %v1610 = vrot.slane %v1560, 7
  %v1611 = vrot.slane %v1580, 7
  %v1612 = vrot.slane %v1600, 7
  %v1613 = vsel %vm337, %v1530, %v1609
  %v1614 = vsel %vm337, %v1550, %v1610
  %v1615 = vsel %vm337, %v1570, %v1611
  %v1616 = vsel %vm337, %v1590, %v1612
  %v1621 = vmul.f32 %v1502, %v1613
  %v1622 = vmul.f32 %v1504, %v1614
  %v1623 = vmul.f32 %v1506, %v1615
  %v1624 = vmul.f32 %v1508, %v1616
  %v1629 = vperm.slane %v1621, 0
  %v1630 = vperm.slane %v1621, 1
  %v1631 = vperm.slane %v1622, 0
  %v1632 = vperm.slane %v1622, 1
  %v1633 = vperm.slane %v1623, 0
  %v1634 = vperm.slane %v1623, 1
  %v1635 = vperm.slane %v1624, 0
  %v1636 = vperm.slane %v1624, 1
  %v1645 = vmul.f32 %v1428, %v1629
  %v1646 = vmul.f32 %v1429, %v1630
  %v1647 = vmul.f32 %v1430, %v1631
  %v1648 = vmul.f32 %v1431, %v1632
  %v1649 = vmul.f32 %v1432, %v1633
  %v1650 = vmul.f32 %v1433, %v1634
  %v1651 = vmul.f32 %v1434, %v1635
  %v1652 = vmul.f32 %v1435, %v1636
  %v1654 = vrot.slane %v1371, 3
  %v1655 = vsel %vm337, %v1371, %v1654
  %v1656 = vsel %vm339, %v1371, %v1654
  %v1657 = vrot.slane %v1656, 1
  %v1658 = vsel %vm342, %v1371, %v1654
  %v1659 = vrot.slane %v1658, 2
  %v1660 = vsel %vm345, %v1371, %v1654
  %v1661 = vrot.slane %v1660, 3
  %v1662 = vperm.slane %v1655, 0
  %v1663 = vperm.slane %v1655, 1
  %v1664 = vperm.slane %v1657, 0
  %v1665 = vperm.slane %v1657, 1
  %v1666 = vperm.slane %v1659, 0
  %v1667 = vperm.slane %v1659, 1
  %v1668 = vperm.slane %v1661, 0
  %v1669 = vperm.slane %v1661, 1
  %v1678 = vadd.f32 %v1645, %v1662
  %v1679 = vadd.f32 %v1646, %v1663
  %v1680 = vadd.f32 %v1647, %v1664
  %v1681 = vadd.f32 %v1648, %v1665
  %v1682 = vadd.f32 %v1649, %v1666
  %v1683 = vadd.f32 %v1650, %v1667
  %v1684 = vadd.f32 %v1651, %v1668
  %v1685 = vadd.f32 %v1652, %v1669
  %v1686 = vmax.f32 %v1678, 0.0
  %v1687 = vmax.f32 %v1679, 0.0
  %v1688 = vmax.f32 %v1680, 0.0
  %v1689 = vmax.f32 %v1681, 0.0
  %v1690 = vmax.f32 %v1682, 0.0
  %v1691 = vmax.f32 %v1683, 0.0
  %v1692 = vmax.f32 %v1684, 0.0
  %v1693 = vmax.f32 %v1685, 0.0
  %1694 = vmatpush.msra.mxu0 %v1228
  %1695 = vmatpush.msra.mxu0 %v1227
  %1696 = vmatpush.msra.mxu0 %v1226
  %1697 = vmatpush.msra.mxu0 %v1225
  %1698 = vmatpush.msra.mxu0 %v1224
  %1699 = vmatpush.msra.mxu0 %v1223
  %1700 = vmatpush.msra.mxu0 %v1222
  %1701 = vmatpush.msra.mxu0 %v1221
  %1702 = vmatpush.msra.mxu0 %v1220
  %1703 = vmatpush.msra.mxu0 %v1219
  %1704 = vmatpush.msra.mxu0 %v1218
  %1705 = vmatpush.msra.mxu0 %v1217
  %1706 = vmatpush.msra.mxu0 %v1216
  %1707 = vmatpush.msra.mxu0 %v1215
  %1708 = vmatpush.msra.mxu0 %v1214
  %1709 = vmatpush.msra.mxu0 %v1213
  %1710 = vmatmul.f32.gmra.mxu0 %v1686
  %v1711 = vpop.f32.mrf.mxu0
  %v1712 = vadd.f32 0.0, %v1711
  %1713 = vmatmul.f32.gmra.mxu0 %v1688
  %v1714 = vpop.f32.mrf.mxu0
  %v1715 = vadd.f32 0.0, %v1714
  %1716 = vmatmul.f32.gmra.mxu0 %v1690
  %v1717 = vpop.f32.mrf.mxu0
  %v1718 = vadd.f32 0.0, %v1717
  %1719 = vmatmul.f32.gmra.mxu0 %v1692
  %v1720 = vpop.f32.mrf.mxu0
  %v1721 = vadd.f32 0.0, %v1720
  %1722 = vdwg.mxu0
  %1723 = vmatpush.msra.mxu0 %v1244
  %1724 = vmatpush.msra.mxu0 %v1243
  %1725 = vmatpush.msra.mxu0 %v1242
  %1726 = vmatpush.msra.mxu0 %v1241
  %1727 = vmatpush.msra.mxu0 %v1240
  %1728 = vmatpush.msra.mxu0 %v1239
  %1729 = vmatpush.msra.mxu0 %v1238
  %1730 = vmatpush.msra.mxu0 %v1237
  %1731 = vmatpush.msra.mxu0 %v1236
  %1732 = vmatpush.msra.mxu0 %v1235
  %1733 = vmatpush.msra.mxu0 %v1234
  %1734 = vmatpush.msra.mxu0 %v1233
  %1735 = vmatpush.msra.mxu0 %v1232
  %1736 = vmatpush.msra.mxu0 %v1231
  %1737 = vmatpush.msra.mxu0 %v1230
  %1738 = vmatpush.msra.mxu0 %v1229
  %1739 = vmatmul.f32.gmra.mxu0 %v1687
  %v1740 = vpop.f32.mrf.mxu0
  %v1741 = vadd.f32 %v1712, %v1740
  %1742 = vmatmul.f32.gmra.mxu0 %v1689
  %v1743 = vpop.f32.mrf.mxu0
  %v1744 = vadd.f32 %v1715, %v1743
  %1745 = vmatmul.f32.gmra.mxu0 %v1691
  %v1746 = vpop.f32.mrf.mxu0
  %v1747 = vadd.f32 %v1718, %v1746
  %1748 = vmatmul.f32.gmra.mxu0 %v1693
  %v1749 = vpop.f32.mrf.mxu0
  %v1750 = vadd.f32 %v1721, %v1749
  %1751 = vdwg.mxu0
  %v1752 = vld [vmem:[%s1368 + $0x8] sm:$0xf]
  %v1753 = vld [vmem:[%s1370 + $0x8] sm:$0xf]
  %v1754 = vrot.slane %v1741, 4
  %v1755 = vadd.f32 %v1741, %v1754
  %v1756 = vrot.slane %v1755, 2
  %v1757 = vadd.f32 %v1755, %v1756
  %v1758 = vrot.slane %v1757, 1
  %v1759 = vadd.f32 %v1757, %v1758
  %v1760 = vrot.slane %v1744, 4
  %v1761 = vadd.f32 %v1744, %v1760
  %v1762 = vrot.slane %v1761, 2
  %v1763 = vadd.f32 %v1761, %v1762
  %v1764 = vrot.slane %v1763, 1
  %v1765 = vadd.f32 %v1763, %v1764
  %v1766 = vrot.slane %v1747, 4
  %v1767 = vadd.f32 %v1747, %v1766
  %v1768 = vrot.slane %v1767, 2
  %v1769 = vadd.f32 %v1767, %v1768
  %v1770 = vrot.slane %v1769, 1
  %v1771 = vadd.f32 %v1769, %v1770
  %v1772 = vrot.slane %v1750, 4
  %v1773 = vadd.f32 %v1750, %v1772
  %v1774 = vrot.slane %v1773, 2
  %v1775 = vadd.f32 %v1773, %v1774
  %v1776 = vrot.slane %v1775, 1
  %v1777 = vadd.f32 %v1775, %v1776
  %v1778 = vmul.f32 %v1759, %v254
  %v1779 = vmul.f32 %v1765, %v254
  %v1780 = vmul.f32 %v1771, %v254
  %v1781 = vmul.f32 %v1777, %v254
  %v1782 = vsub.f32 %v1741, %v1778
  %v1783 = vsub.f32 %v1744, %v1779
  %v1784 = vsub.f32 %v1747, %v1780
  %v1785 = vsub.f32 %v1750, %v1781
  %v1786 = vmul.f32 %v1782, %v1782
  %v1787 = vmul.f32 %v1783, %v1783
  %v1788 = vmul.f32 %v1784, %v1784
  %v1789 = vmul.f32 %v1785, %v1785
  %v1790 = vrot.slane %v1786, 4
  %v1791 = vadd.f32 %v1786, %v1790
  %v1792 = vrot.slane %v1791, 2
  %v1793 = vadd.f32 %v1791, %v1792
  %v1794 = vrot.slane %v1793, 1
  %v1795 = vadd.f32 %v1793, %v1794
  %v1796 = vrot.slane %v1787, 4
  %v1797 = vadd.f32 %v1787, %v1796
  %v1798 = vrot.slane %v1797, 2
  %v1799 = vadd.f32 %v1797, %v1798
  %v1800 = vrot.slane %v1799, 1
  %v1801 = vadd.f32 %v1799, %v1800
  %v1802 = vrot.slane %v1788, 4
  %v1803 = vadd.f32 %v1788, %v1802
  %v1804 = vrot.slane %v1803, 2
  %v1805 = vadd.f32 %v1803, %v1804
  %v1806 = vrot.slane %v1805, 1
  %v1807 = vadd.f32 %v1805, %v1806
  %v1808 = vrot.slane %v1789, 4
  %v1809 = vadd.f32 %v1789, %v1808
  %v1810 = vrot.slane %v1809, 2
  %v1811 = vadd.f32 %v1809, %v1810
  %v1812 = vrot.slane %v1811, 1
  %v1813 = vadd.f32 %v1811, %v1812
  %v1814 = vmul.f32 %v1795, %v254
  %v1815 = vmul.f32 %v1801, %v254
  %v1816 = vmul.f32 %v1807, %v254
  %v1817 = vmul.f32 %v1813, %v254
  %v1819 = vrot.slane %v1752, 3
  %v1820 = vsel %vm337, %v1752, %v1819
  %v1821 = vsel %vm339, %v1752, %v1819
  %v1822 = vrot.slane %v1821, 1
  %v1823 = vsel %vm342, %v1752, %v1819
  %v1824 = vrot.slane %v1823, 2
  %v1825 = vsel %vm345, %v1752, %v1819
  %v1826 = vrot.slane %v1825, 3
  %v1831 = vadd.f32 %v1814, 1e-05
  %v1832 = vadd.f32 %v1815, 1e-05
  %v1833 = vadd.f32 %v1816, 1e-05
  %v1834 = vadd.f32 %v1817, 1e-05
  %v1835 = vrsqrt.pop %v1831
  %v1836 = vmul.f32 %v1835, %v1831
  %v1837 = vmul.f32 %v1836, %v1835
  %v1838 = vmul.f32 0.5, %v1837
  %v1839 = vsub.f32 1.5, %v1838
  %v1840 = vmul.f32 %v1835, %v1839
  %vm1841 = vweird.f32 %v1831
  %vm1842 = vweird.f32 %v1835
  %vm1843 = vmor %vm1841, %vm1842
  %v1844 = vsel %vm1843, %v1835, %v1840
  %v1845 = vrsqrt.pop %v1832
  %v1846 = vmul.f32 %v1845, %v1832
  %v1847 = vmul.f32 %v1846, %v1845
  %v1848 = vmul.f32 0.5, %v1847
  %v1849 = vsub.f32 1.5, %v1848
  %v1850 = vmul.f32 %v1845, %v1849
  %vm1851 = vweird.f32 %v1832
  %vm1852 = vweird.f32 %v1845
  %vm1853 = vmor %vm1851, %vm1852
  %v1854 = vsel %vm1853, %v1845, %v1850
  %v1855 = vrsqrt.pop %v1833
  %v1856 = vmul.f32 %v1855, %v1833
  %v1857 = vmul.f32 %v1856, %v1855
  %v1858 = vmul.f32 0.5, %v1857
  %v1859 = vsub.f32 1.5, %v1858
  %v1860 = vmul.f32 %v1855, %v1859
  %vm1861 = vweird.f32 %v1833
  %vm1862 = vweird.f32 %v1855
  %vm1863 = vmor %vm1861, %vm1862
  %v1864 = vsel %vm1863, %v1855, %v1860
  %v1865 = vrsqrt.pop %v1834
  %v1866 = vmul.f32 %v1865, %v1834
  %v1867 = vmul.f32 %v1866, %v1865
  %v1868 = vmul.f32 0.5, %v1867
  %v1869 = vsub.f32 1.5, %v1868
  %v1870 = vmul.f32 %v1865, %v1869
  %vm1871 = vweird.f32 %v1834
  %vm1872 = vweird.f32 %v1865
  %vm1873 = vmor %vm1871, %vm1872
  %v1874 = vsel %vm1873, %v1865, %v1870
  %v1875 = vmul.f32 %v1820, %v1844
  %v1876 = vmul.f32 %v1822, %v1854
  %v1877 = vmul.f32 %v1824, %v1864
  %v1878 = vmul.f32 %v1826, %v1874
  %v1883 = vperm.slane %v1875, 0
  %v1884 = vperm.slane %v1876, 0
  %v1885 = vperm.slane %v1877, 0
  %v1886 = vperm.slane %v1878, 0
  %v1891 = vmul.f32 %v1782, %v1883
  %v1892 = vmul.f32 %v1783, %v1884
  %v1893 = vmul.f32 %v1784, %v1885
  %v1894 = vmul.f32 %v1785, %v1886
  %v1896 = vrot.slane %v1753, 3
  %v1897 = vsel %vm337, %v1753, %v1896
  %v1898 = vsel %vm339, %v1753, %v1896
  %v1899 = vrot.slane %v1898, 1
  %v1900 = vsel %vm342, %v1753, %v1896
  %v1901 = vrot.slane %v1900, 2
  %v1902 = vsel %vm345, %v1753, %v1896
  %v1903 = vrot.slane %v1902, 3
  %v1904 = vperm.slane %v1897, 0
  %v1905 = vperm.slane %v1899, 0
  %v1906 = vperm.slane %v1901, 0
  %v1907 = vperm.slane %v1903, 0
  %v1912 = vadd.f32 %v1891, %v1904
  %v1913 = vadd.f32 %v1892, %v1905
  %v1914 = vadd.f32 %v1893, %v1906
  %v1915 = vadd.f32 %v1894, %v1907
  %v1916 = vmax.f32 %v1912, 0.0
  %v1917 = vmax.f32 %v1913, 0.0
  %v1918 = vmax.f32 %v1914, 0.0
  %v1919 = vmax.f32 %v1915, 0.0
  %1920 = vmatpush.msra.mxu0 %v1275
  %1921 = vmatpush.msra.mxu0 %v1273
  %1922 = vmatpush.msra.mxu0 %v1271
  %1923 = vmatpush.msra.mxu0 %v1269
  %1924 = vmatpush.msra.mxu0 %v1267
  %1925 = vmatpush.msra.mxu0 %v1265
  %1926 = vmatpush.msra.mxu0 %v1263
  %1927 = vmatpush.msra.mxu0 %v1261
  %1928 = vmatpush.msra.mxu0 %v1259
  %1929 = vmatpush.msra.mxu0 %v1257
  %1930 = vmatpush.msra.mxu0 %v1255
  %1931 = vmatpush.msra.mxu0 %v1253
  %1932 = vmatpush.msra.mxu0 %v1251
  %1933 = vmatpush.msra.mxu0 %v1249
  %1934 = vmatpush.msra.mxu0 %v1247
  %1935 = vmatpush.msra.mxu0 %v1245
  %1936 = vmatmul.f32.gmra.mxu0 %v1916
  %v1937 = vpop.f32.mrf.mxu0
  %v1938 = vadd.f32 0.0, %v1937
  %1939 = vmatmul.f32.gmra.mxu0 %v1917
  %v1940 = vpop.f32.mrf.mxu0
  %v1941 = vadd.f32 0.0, %v1940
  %1942 = vmatmul.f32.gmra.mxu0 %v1918
  %v1943 = vpop.f32.mrf.mxu0
  %v1944 = vadd.f32 0.0, %v1943
  %1945 = vmatmul.f32.gmra.mxu0 %v1919
  %v1946 = vpop.f32.mrf.mxu0
  %v1947 = vadd.f32 0.0, %v1946
  %1948 = vdwg.mxu0
  %1949 = vmatpush.msra.mxu0 %v1276
  %1950 = vmatpush.msra.mxu0 %v1274
  %1951 = vmatpush.msra.mxu0 %v1272
  %1952 = vmatpush.msra.mxu0 %v1270
  %1953 = vmatpush.msra.mxu0 %v1268
  %1954 = vmatpush.msra.mxu0 %v1266
  %1955 = vmatpush.msra.mxu0 %v1264
  %1956 = vmatpush.msra.mxu0 %v1262
  %1957 = vmatpush.msra.mxu0 %v1260
  %1958 = vmatpush.msra.mxu0 %v1258
  %1959 = vmatpush.msra.mxu0 %v1256
  %1960 = vmatpush.msra.mxu0 %v1254
  %1961 = vmatpush.msra.mxu0 %v1252
  %1962 = vmatpush.msra.mxu0 %v1250
  %1963 = vmatpush.msra.mxu0 %v1248
  %1964 = vmatpush.msra.mxu0 %v1246
  %1965 = vmatmul.f32.gmra.mxu0 %v1916
  %v1966 = vpop.f32.mrf.mxu0
  %v1967 = vadd.f32 0.0, %v1966
  %1968 = vmatmul.f32.gmra.mxu0 %v1917
  %v1969 = vpop.f32.mrf.mxu0
  %v1970 = vadd.f32 0.0, %v1969
  %1971 = vmatmul.f32.gmra.mxu0 %v1918
  %v1972 = vpop.f32.mrf.mxu0
  %v1973 = vadd.f32 0.0, %v1972
  %1974 = vmatmul.f32.gmra.mxu0 %v1919
  %v1975 = vpop.f32.mrf.mxu0
  %v1976 = vadd.f32 0.0, %v1975
  %1977 = vdwg.mxu0
  %v1978 = vld [vmem:[%s1368 + $0xc] sm:$0xff]
  %v1979 = vld [vmem:[%s1370 + $0xc] sm:$0xff]
  %v1980 = vrot.slane %v1938, 4
  %v1981 = vadd.f32 %v1938, %v1980
  %v1982 = vrot.slane %v1981, 2
  %v1983 = vadd.f32 %v1981, %v1982
  %v1984 = vrot.slane %v1983, 1
  %v1985 = vadd.f32 %v1983, %v1984
  %v1986 = vrot.slane %v1967, 4
  %v1987 = vadd.f32 %v1967, %v1986
  %v1988 = vrot.slane %v1987, 2
  %v1989 = vadd.f32 %v1987, %v1988
  %v1990 = vrot.slane %v1989, 1
  %v1991 = vadd.f32 %v1989, %v1990
  %v1992 = vrot.slane %v1941, 4
  %v1993 = vadd.f32 %v1941, %v1992
  %v1994 = vrot.slane %v1993, 2
  %v1995 = vadd.f32 %v1993, %v1994
  %v1996 = vrot.slane %v1995, 1
  %v1997 = vadd.f32 %v1995, %v1996
  %v1998 = vrot.slane %v1970, 4
  %v1999 = vadd.f32 %v1970, %v1998
  %v2000 = vrot.slane %v1999, 2
  %v2001 = vadd.f32 %v1999, %v2000
  %v2002 = vrot.slane %v2001, 1
  %v2003 = vadd.f32 %v2001, %v2002
  %v2004 = vrot.slane %v1944, 4
  %v2005 = vadd.f32 %v1944, %v2004
  %v2006 = vrot.slane %v2005, 2
  %v2007 = vadd.f32 %v2005, %v2006
  %v2008 = vrot.slane %v2007, 1
  %v2009 = vadd.f32 %v2007, %v2008
  %v2010 = vrot.slane %v1973, 4
  %v2011 = vadd.f32 %v1973, %v2010
  %v2012 = vrot.slane %v2011, 2
  %v2013 = vadd.f32 %v2011, %v2012
  %v2014 = vrot.slane %v2013, 1
  %v2015 = vadd.f32 %v2013, %v2014
  %v2016 = vrot.slane %v1947, 4
  %v2017 = vadd.f32 %v1947, %v2016
  %v2018 = vrot.slane %v2017, 2
  %v2019 = vadd.f32 %v2017, %v2018
  %v2020 = vrot.slane %v2019, 1
  %v2021 = vadd.f32 %v2019, %v2020
  %v2022 = vrot.slane %v1976, 4
  %v2023 = vadd.f32 %v1976, %v2022
  %v2024 = vrot.slane %v2023, 2
  %v2025 = vadd.f32 %v2023, %v2024
  %v2026 = vrot.slane %v2025, 1
  %v2027 = vadd.f32 %v2025, %v2026
  %v2028 = vmul.f32 %v1985, %v254
  %v2029 = vmul.f32 %v1991, %v254
  %v2030 = vmul.f32 %v1997, %v254
  %v2031 = vmul.f32 %v2003, %v254
  %v2032 = vmul.f32 %v2009, %v254
  %v2033 = vmul.f32 %v2015, %v254
  %v2034 = vmul.f32 %v2021, %v254
  %v2035 = vmul.f32 %v2027, %v254
  %v2036 = vsub.f32 %v1938, %v2028
  %v2037 = vsub.f32 %v1967, %v2029
  %v2038 = vsub.f32 %v1941, %v2030
  %v2039 = vsub.f32 %v1970, %v2031
  %v2040 = vsub.f32 %v1944, %v2032
  %v2041 = vsub.f32 %v1973, %v2033
  %v2042 = vsub.f32 %v1947, %v2034
  %v2043 = vsub.f32 %v1976, %v2035
  %v2044 = vmul.f32 %v2036, %v2036
  %v2045 = vmul.f32 %v2037, %v2037
  %v2046 = vmul.f32 %v2038, %v2038
  %v2047 = vmul.f32 %v2039, %v2039
  %v2048 = vmul.f32 %v2040, %v2040
  %v2049 = vmul.f32 %v2041, %v2041
  %v2050 = vmul.f32 %v2042, %v2042
  %v2051 = vmul.f32 %v2043, %v2043
  %v2052 = vrot.slane %v2044, 4
  %v2053 = vadd.f32 %v2044, %v2052
  %v2054 = vrot.slane %v2053, 2
  %v2055 = vadd.f32 %v2053, %v2054
  %v2056 = vrot.slane %v2055, 1
  %v2057 = vadd.f32 %v2055, %v2056
  %v2058 = vrot.slane %v2045, 4
  %v2059 = vadd.f32 %v2045, %v2058
  %v2060 = vrot.slane %v2059, 2
  %v2061 = vadd.f32 %v2059, %v2060
  %v2062 = vrot.slane %v2061, 1
  %v2063 = vadd.f32 %v2061, %v2062
  %v2064 = vrot.slane %v2046, 4
  %v2065 = vadd.f32 %v2046, %v2064
  %v2066 = vrot.slane %v2065, 2
  %v2067 = vadd.f32 %v2065, %v2066
  %v2068 = vrot.slane %v2067, 1
  %v2069 = vadd.f32 %v2067, %v2068
  %v2070 = vrot.slane %v2047, 4
  %v2071 = vadd.f32 %v2047, %v2070
  %v2072 = vrot.slane %v2071, 2
  %v2073 = vadd.f32 %v2071, %v2072
  %v2074 = vrot.slane %v2073, 1
  %v2075 = vadd.f32 %v2073, %v2074
  %v2076 = vrot.slane %v2048, 4
  %v2077 = vadd.f32 %v2048, %v2076
  %v2078 = vrot.slane %v2077, 2
  %v2079 = vadd.f32 %v2077, %v2078
  %v2080 = vrot.slane %v2079, 1
  %v2081 = vadd.f32 %v2079, %v2080
  %v2082 = vrot.slane %v2049, 4
  %v2083 = vadd.f32 %v2049, %v2082
  %v2084 = vrot.slane %v2083, 2
  %v2085 = vadd.f32 %v2083, %v2084
  %v2086 = vrot.slane %v2085, 1
  %v2087 = vadd.f32 %v2085, %v2086
  %v2088 = vrot.slane %v2050, 4
  %v2089 = vadd.f32 %v2050, %v2088
  %v2090 = vrot.slane %v2089, 2
  %v2091 = vadd.f32 %v2089, %v2090
  %v2092 = vrot.slane %v2091, 1
  %v2093 = vadd.f32 %v2091, %v2092
  %v2094 = vrot.slane %v2051, 4
  %v2095 = vadd.f32 %v2051, %v2094
  %v2096 = vrot.slane %v2095, 2
  %v2097 = vadd.f32 %v2095, %v2096
  %v2098 = vrot.slane %v2097, 1
  %v2099 = vadd.f32 %v2097, %v2098
  %v2100 = vmul.f32 %v2057, %v254
  %v2101 = vmul.f32 %v2063, %v254
  %v2102 = vmul.f32 %v2069, %v254
  %v2103 = vmul.f32 %v2075, %v254
  %v2104 = vmul.f32 %v2081, %v254
  %v2105 = vmul.f32 %v2087, %v254
  %v2106 = vmul.f32 %v2093, %v254
  %v2107 = vmul.f32 %v2099, %v254
  %v2109 = vrot.slane %v1978, 3
  %v2110 = vsel %vm337, %v1978, %v2109
  %v2111 = vsel %vm339, %v1978, %v2109
  %v2112 = vrot.slane %v2111, 1
  %v2113 = vsel %vm342, %v1978, %v2109
  %v2114 = vrot.slane %v2113, 2
  %v2115 = vsel %vm345, %v1978, %v2109
  %v2116 = vrot.slane %v2115, 3
  %v2121 = vadd.f32 %v2100, 1e-05
  %v2122 = vadd.f32 %v2101, 1e-05
  %v2123 = vadd.f32 %v2102, 1e-05
  %v2124 = vadd.f32 %v2103, 1e-05
  %v2125 = vadd.f32 %v2104, 1e-05
  %v2126 = vadd.f32 %v2105, 1e-05
  %v2127 = vadd.f32 %v2106, 1e-05
  %v2128 = vadd.f32 %v2107, 1e-05
  %v2129 = vrsqrt.pop %v2121
  %v2130 = vmul.f32 %v2129, %v2121
  %v2131 = vmul.f32 %v2130, %v2129
  %v2132 = vmul.f32 0.5, %v2131
  %v2133 = vsub.f32 1.5, %v2132
  %v2134 = vmul.f32 %v2129, %v2133
  %vm2135 = vweird.f32 %v2121
  %vm2136 = vweird.f32 %v2129
  %vm2137 = vmor %vm2135, %vm2136
  %v2138 = vsel %vm2137, %v2129, %v2134
  %v2139 = vrsqrt.pop %v2122
  %v2140 = vmul.f32 %v2139, %v2122
  %v2141 = vmul.f32 %v2140, %v2139
  %v2142 = vmul.f32 0.5, %v2141
  %v2143 = vsub.f32 1.5, %v2142
  %v2144 = vmul.f32 %v2139, %v2143
  %vm2145 = vweird.f32 %v2122
  %vm2146 = vweird.f32 %v2139
  %vm2147 = vmor %vm2145, %vm2146
  %v2148 = vsel %vm2147, %v2139, %v2144
  %v2149 = vrsqrt.pop %v2123
  %v2150 = vmul.f32 %v2149, %v2123
  %v2151 = vmul.f32 %v2150, %v2149
  %v2152 = vmul.f32 0.5, %v2151
  %v2153 = vsub.f32 1.5, %v2152
  %v2154 = vmul.f32 %v2149, %v2153
  %vm2155 = vweird.f32 %v2123
  %vm2156 = vweird.f32 %v2149
  %vm2157 = vmor %vm2155, %vm2156
  %v2158 = vsel %vm2157, %v2149, %v2154
  %v2159 = vrsqrt.pop %v2124
  %v2160 = vmul.f32 %v2159, %v2124
  %v2161 = vmul.f32 %v2160, %v2159
  %v2162 = vmul.f32 0.5, %v2161
  %v2163 = vsub.f32 1.5, %v2162
  %v2164 = vmul.f32 %v2159, %v2163
  %vm2165 = vweird.f32 %v2124
  %vm2166 = vweird.f32 %v2159
  %vm2167 = vmor %vm2165, %vm2166
  %v2168 = vsel %vm2167, %v2159, %v2164
  %v2169 = vrsqrt.pop %v2125
  %v2170 = vmul.f32 %v2169, %v2125
  %v2171 = vmul.f32 %v2170, %v2169
  %v2172 = vmul.f32 0.5, %v2171
  %v2173 = vsub.f32 1.5, %v2172
  %v2174 = vmul.f32 %v2169, %v2173
  %vm2175 = vweird.f32 %v2125
  %vm2176 = vweird.f32 %v2169
  %vm2177 = vmor %vm2175, %vm2176
  %v2178 = vsel %vm2177, %v2169, %v2174
  %v2179 = vrsqrt.pop %v2126
  %v2180 = vmul.f32 %v2179, %v2126
  %v2181 = vmul.f32 %v2180, %v2179
  %v2182 = vmul.f32 0.5, %v2181
  %v2183 = vsub.f32 1.5, %v2182
  %v2184 = vmul.f32 %v2179, %v2183
  %vm2185 = vweird.f32 %v2126
  %vm2186 = vweird.f32 %v2179
  %vm2187 = vmor %vm2185, %vm2186
  %v2188 = vsel %vm2187, %v2179, %v2184
  %v2189 = vrsqrt.pop %v2127
  %v2190 = vmul.f32 %v2189, %v2127
  %v2191 = vmul.f32 %v2190, %v2189
  %v2192 = vmul.f32 0.5, %v2191
  %v2193 = vsub.f32 1.5, %v2192
  %v2194 = vmul.f32 %v2189, %v2193
  %vm2195 = vweird.f32 %v2127
  %vm2196 = vweird.f32 %v2189
  %vm2197 = vmor %vm2195, %vm2196
  %v2198 = vsel %vm2197, %v2189, %v2194
  %v2199 = vrsqrt.pop %v2128
  %v2200 = vmul.f32 %v2199, %v2128
  %v2201 = vmul.f32 %v2200, %v2199
  %v2202 = vmul.f32 0.5, %v2201
  %v2203 = vsub.f32 1.5, %v2202
  %v2204 = vmul.f32 %v2199, %v2203
  %vm2205 = vweird.f32 %v2128
  %vm2206 = vweird.f32 %v2199
  %vm2207 = vmor %vm2205, %vm2206
  %v2208 = vsel %vm2207, %v2199, %v2204
  %v2217 = vrot.slane %v2148, 7
  %v2218 = vrot.slane %v2168, 7
  %v2219 = vrot.slane %v2188, 7
  %v2220 = vrot.slane %v2208, 7
  %v2221 = vsel %vm337, %v2138, %v2217
  %v2222 = vsel %vm337, %v2158, %v2218
  %v2223 = vsel %vm337, %v2178, %v2219
  %v2224 = vsel %vm337, %v2198, %v2220
  %v2229 = vmul.f32 %v2110, %v2221
  %v2230 = vmul.f32 %v2112, %v2222
  %v2231 = vmul.f32 %v2114, %v2223
  %v2232 = vmul.f32 %v2116, %v2224
  %v2237 = vperm.slane %v2229, 0
  %v2238 = vperm.slane %v2229, 1
  %v2239 = vperm.slane %v2230, 0
  %v2240 = vperm.slane %v2230, 1
  %v2241 = vperm.slane %v2231, 0
  %v2242 = vperm.slane %v2231, 1
  %v2243 = vperm.slane %v2232, 0
  %v2244 = vperm.slane %v2232, 1
  %v2253 = vmul.f32 %v2036, %v2237
  %v2254 = vmul.f32 %v2037, %v2238
  %v2255 = vmul.f32 %v2038, %v2239
  %v2256 = vmul.f32 %v2039, %v2240
  %v2257 = vmul.f32 %v2040, %v2241
  %v2258 = vmul.f32 %v2041, %v2242
  %v2259 = vmul.f32 %v2042, %v2243
  %v2260 = vmul.f32 %v2043, %v2244
  %v2262 = vrot.slane %v1979, 3
  %v2263 = vsel %vm337, %v1979, %v2262
  %v2264 = vsel %vm339, %v1979, %v2262
  %v2265 = vrot.slane %v2264, 1
  %v2266 = vsel %vm342, %v1979, %v2262
  %v2267 = vrot.slane %v2266, 2
  %v2268 = vsel %vm345, %v1979, %v2262
  %v2269 = vrot.slane %v2268, 3
  %v2270 = vperm.slane %v2263, 0
  %v2271 = vperm.slane %v2263, 1
  %v2272 = vperm.slane %v2265, 0
  %v2273 = vperm.slane %v2265, 1
  %v2274 = vperm.slane %v2267, 0
  %v2275 = vperm.slane %v2267, 1
  %v2276 = vperm.slane %v2269, 0
  %v2277 = vperm.slane %v2269, 1
  %v2286 = vadd.f32 %v2253, %v2270
  %v2287 = vadd.f32 %v2254, %v2271
  %v2288 = vadd.f32 %v2255, %v2272
  %v2289 = vadd.f32 %v2256, %v2273
  %v2290 = vadd.f32 %v2257, %v2274
  %v2291 = vadd.f32 %v2258, %v2275
  %v2292 = vadd.f32 %v2259, %v2276
  %v2293 = vadd.f32 %v2260, %v2277
  %v2294 = vmax.f32 %v2286, 0.0
  %v2295 = vmax.f32 %v2287, 0.0
  %v2296 = vmax.f32 %v2288, 0.0
  %v2297 = vmax.f32 %v2289, 0.0
  %v2298 = vmax.f32 %v2290, 0.0
  %v2299 = vmax.f32 %v2291, 0.0
  %v2300 = vmax.f32 %v2292, 0.0
  %v2301 = vmax.f32 %v2293, 0.0
  %2302 = vmatpush.msra.mxu0 %v1292
  %2303 = vmatpush.msra.mxu0 %v1291
  %2304 = vmatpush.msra.mxu0 %v1290
  %2305 = vmatpush.msra.mxu0 %v1289
  %2306 = vmatpush.msra.mxu0 %v1288
  %2307 = vmatpush.msra.mxu0 %v1287
  %2308 = vmatpush.msra.mxu0 %v1286
  %2309 = vmatpush.msra.mxu0 %v1285
  %2310 = vmatpush.msra.mxu0 %v1284
  %2311 = vmatpush.msra.mxu0 %v1283
  %2312 = vmatpush.msra.mxu0 %v1282
  %2313 = vmatpush.msra.mxu0 %v1281
  %2314 = vmatpush.msra.mxu0 %v1280
  %2315 = vmatpush.msra.mxu0 %v1279
  %2316 = vmatpush.msra.mxu0 %v1278
  %2317 = vmatpush.msra.mxu0 %v1277
  %2318 = vmatmul.f32.gmra.mxu0 %v2294
  %v2319 = vpop.f32.mrf.mxu0
  %v2320 = vadd.f32 %v1309, %v2319
  %2321 = vmatmul.f32.gmra.mxu0 %v2296
  %v2322 = vpop.f32.mrf.mxu0
  %v2323 = vadd.f32 %v1309, %v2322
  %2324 = vmatmul.f32.gmra.mxu0 %v2298
  %v2325 = vpop.f32.mrf.mxu0
  %v2326 = vadd.f32 %v1309, %v2325
  %2327 = vmatmul.f32.gmra.mxu0 %v2300
  %v2328 = vpop.f32.mrf.mxu0
  %v2329 = vadd.f32 %v1309, %v2328
  %2330 = vdwg.mxu0
  %2331 = vmatpush.msra.mxu0 %v1308
  %2332 = vmatpush.msra.mxu0 %v1307
  %2333 = vmatpush.msra.mxu0 %v1306
  %2334 = vmatpush.msra.mxu0 %v1305
  %2335 = vmatpush.msra.mxu0 %v1304
  %2336 = vmatpush.msra.mxu0 %v1303
  %2337 = vmatpush.msra.mxu0 %v1302
  %2338 = vmatpush.msra.mxu0 %v1301
  %2339 = vmatpush.msra.mxu0 %v1300
  %2340 = vmatpush.msra.mxu0 %v1299
  %2341 = vmatpush.msra.mxu0 %v1298
  %2342 = vmatpush.msra.mxu0 %v1297
  %2343 = vmatpush.msra.mxu0 %v1296
  %2344 = vmatpush.msra.mxu0 %v1295
  %2345 = vmatpush.msra.mxu0 %v1294
  %2346 = vmatpush.msra.mxu0 %v1293
  %2347 = vmatmul.f32.gmra.mxu0 %v2295
  %v2348 = vpop.f32.mrf.mxu0
  %v2349 = vadd.f32 %v2320, %v2348
  %2350 = vmatmul.f32.gmra.mxu0 %v2297
  %v2351 = vpop.f32.mrf.mxu0
  %v2352 = vadd.f32 %v2323, %v2351
  %2353 = vmatmul.f32.gmra.mxu0 %v2299
  %v2354 = vpop.f32.mrf.mxu0
  %v2355 = vadd.f32 %v2326, %v2354
  %2356 = vmatmul.f32.gmra.mxu0 %v2301
  %v2357 = vpop.f32.mrf.mxu0
  %v2358 = vadd.f32 %v2329, %v2357
  %2359 = vdwg.mxu0
  %s2360 = scalar_lea.vmem %s4, 32
  %2361 = vst.msk [vmem:[%s2360] sm:$0xff] %vm126, %v2349
  %2362 = vst.msk [vmem:[%s2360 + $0x8] sm:$0xff] %vm126, %v2352
  %2363 = vst.msk [vmem:[%s2360 + $0x10] sm:$0xff] %vm126, %v2355
  %2364 = vst.msk [vmem:[%s2360 + $0x18] sm:$0xff] %vm126, %v2358
  // Predicated region
  $region18: #{mean_variance_regressor.1} parent=0 // pred_check
    _
  $region19: #{mean_variance_regressor.1} parent=0 // pred_check_branch
    %2366 = sbr.rel (0) target = $region21
  $region20: #{mean_variance_regressor.1} parent=0 // pred_region
    _
  $region21: #{mean_variance_regressor.1} parent=0 // pred_fallthru
    _
  // Predicated region
  $region22: #{mean_variance_regressor.1} parent=0 // pred_check
    _
  $region23: #{mean_variance_regressor.1} parent=0 // pred_check_branch
    %2368 = sbr.rel (0) target = $region25
  $region24: #{mean_variance_regressor.1} parent=0 // pred_region
    _
  $region25: #{mean_variance_regressor.1} parent=0 // pred_fallthru
    _

</llo_original>
